<compile_context>
chip_gen: v5e
topology: v5e:2x2
jax: 0.10.0
libtpu: 0.0.40
codegen_flags: <defaults>
</compile_context>

<pallas_src>
import functools

import numpy as np
import jax
import jax.numpy as jnp
from jax.experimental import pallas as pl
from jax.experimental.pallas import tpu as pltpu

N_POS_DIMS = 3
_PRIMES = (1, 2654435761, 805459861)  # tcnn coherent-prime hash primes for dims 0..2


def _wrap_i32(v: int) -> int:
    v &= 0xFFFFFFFF
    return v - (1 << 32) if v >= (1 << 31) else v


# --------------------------- Pallas kernel ---------------------------------------------------
def _hashgrid_kernel(scale_ref, res_ref, hsize_ref, uhash_ref, x_ref, tab_ref,
                     o_ref, acc_ref, *, chunk_t, onehot_dtype):
    lvl = pl.program_id(0)
    scale = scale_ref[lvl]          # f32 scalar (SMEM)
    res = res_ref[lvl]              # i32 scalar
    hsize = hsize_ref[lvl]          # i32 scalar
    use_hash = uhash_ref[lvl]       # i32 scalar (0/1)

    nt = x_ref.shape[1]

    # pos = scale * x + 0.5 ; split into integer cell + fractional part (tcnn pos_fract)
    pos = x_ref[...] * scale + 0.5                       # (D, Nt)
    pos_floor = jnp.floor(pos)
    frac = pos - pos_floor                               # (D, Nt)
    cell = pos_floor.astype(jnp.int32)                   # (D, Nt)

    frac_d = [frac[d:d + 1, :] for d in range(N_POS_DIMS)]
    cell_d = [cell[d:d + 1, :] for d in range(N_POS_DIMS)]

    strides = [jnp.int32(1), res, res * res]             # dense-grid strides res**d
    hash_mask = hsize - 1                                 # hashed levels: power of two (asserted)

    # Precompute all 8 corner (hash-table index, trilinear weight) pairs once per tile.
    # Weights are cast to the one-hot build dtype HERE (hoisted out of the chunk loop).
    idx_list = []
    w_list = []
    for corner in range(1 << N_POS_DIMS):
        weight = jnp.ones((1, nt), jnp.float32)
        dense_idx = jnp.zeros((1, nt), jnp.int32)
        hash_idx = jnp.zeros((1, nt), jnp.int32)
        for d in range(N_POS_DIMS):
            bit = (corner >> d) & 1
            coord = cell_d[d] + bit
            weight = weight * (frac_d[d] if bit else (1.0 - frac_d[d]))
            dense_idx = dense_idx + coord * strides[d]
            hash_idx = hash_idx ^ (coord * jnp.int32(_wrap_i32(_PRIMES[d])))
        # Dense path: 0 <= dense_idx < 2*hashmap_size (asserted host-side for inputs in [0,1]),
        # so the modulo is an exact single conditional subtract (no f32 division).
        dense_mod = jnp.where(dense_idx >= hsize, dense_idx - hsize, dense_idx)
        # Hash path: coherent-prime hash; hashmap size is a power of two.
        hash_mod = hash_idx & hash_mask
        idx_list.append(jnp.where(use_hash != 0, hash_mod, dense_mod))      # (1, Nt) i32
        w_list.append(weight.astype(onehot_dtype))                          # (1, Nt)

    # Loop-invariant row iota (sublane axis only; broadcast happens inside the compare).
    row_iota = jax.lax.broadcasted_iota(jnp.int32, (chunk_t, 1), 0)
    zero = jnp.zeros((), onehot_dtype)

    acc_ref[...] = jnp.zeros_like(acc_ref)

    # Walk the table in chunks; skip everything past this level's hashmap_size.
    num_chunks = pl.cdiv(hsize, chunk_t)

    @pl.loop(0, num_chunks)
    def _(c):
        base = pl.multiple_of(c * chunk_t, chunk_t)
        # Weighted multi-hot chunk (chunk_t, Nt): built once (corner 0 is the init — no zeros),
        # in onehot_dtype (bf16 on v6e/v7x, f32 on v5e).
        w = jnp.where(row_iota == (idx_list[0] - base), w_list[0], zero)
        for corner in range(1, 1 << N_POS_DIMS):
            w = w + jnp.where(row_iota == (idx_list[corner] - base),
                              w_list[corner], zero)
        if onehot_dtype != jnp.bfloat16:
            w = w.astype(jnp.bfloat16)     # cast only at the MXU operand (v5e path)
        # (F, chunk_t) @ (chunk_t, Nt) on the MXU, bf16 inputs, f32 accumulation.
        tab_chunk = tab_ref[0, :, pl.ds(base, chunk_t)]            # (F, chunk_t) bf16
        acc_ref[...] += jnp.dot(tab_chunk, w, preferred_element_type=jnp.float32)

    o_ref[0] = acc_ref[...].astype(o_ref.dtype)


# --------------------------- host-side level constants (mirror tcnn) -------------------------
def make_level_params(n_levels, n_pos_dims, base_resolution, per_level_scale, log2_hashmap_size):
    scales = np.zeros((n_levels,), np.float32)
    resolutions = np.zeros((n_levels,), np.int32)
    hashmap_sizes = np.zeros((n_levels,), np.int32)
    use_hash = np.zeros((n_levels,), np.int32)
    for lvl in range(n_levels):
        scale = np.float32(
            np.exp2(np.float32(lvl) * np.log2(np.float32(per_level_scale)))
            * np.float32(base_resolution) - np.float32(1.0))
        res = int(np.ceil(scale)) + 1
        params_in_level = res ** n_pos_dims
        params_in_level = -(-params_in_level // 8) * 8          # next multiple of 8
        params_in_level = min(params_in_level, 1 << log2_hashmap_size)
        stride = 1
        for _ in range(n_pos_dims):                             # tcnn grid_index stride loop
            if stride > params_in_level:
                break
            stride *= res
        hashed = 1 if params_in_level < stride else 0
        if hashed:
            # kernel masks with (hsize - 1): hashed levels must be a power of two
            assert params_in_level & (params_in_level - 1) == 0, "hashed level not pow2"
        else:
            # kernel's dense modulo is a single conditional subtract: needs
            # max corner index (sum_d res**(d+1)) < 2 * hashmap_size
            max_dense = sum(res ** (d + 1) for d in range(n_pos_dims))
            assert max_dense < 2 * params_in_level, "dense level violates conditional-sub bound"
        scales[lvl] = scale
        resolutions[lvl] = res
        hashmap_sizes[lvl] = params_in_level
        use_hash[lvl] = hashed
    return scales, resolutions, hashmap_sizes, use_hash


# --------------------------- chip-dependent defaults ------------------------------------------
def _default_onehot_dtype():
    kind = ""
    try:
        kind = jax.devices()[0].device_kind.lower()
    except Exception:
        pass
    # bf16 VALUs exist on v6e / v7x; v5e (and older) would just widen bf16 -> build in f32 there.
    if ("v6" in kind) or ("v7" in kind):
        return jnp.bfloat16
    return jnp.float32


# --------------------------- wrapper ---------------------------------------------------------
def hashgrid_encode(x, table, scales, resolutions, hashmap_sizes, use_hash,
                    *, tile_n=None, chunk_t=128, onehot_dtype=None):
    n, d = x.shape
    assert d == N_POS_DIMS
    l, f, t = table.shape
    if onehot_dtype is None:
        onehot_dtype = _default_onehot_dtype()
    if tile_n is None:
        # bf16 one-hot: (128, 512) = 32 vregs, still resident; f32 one-hot: keep (128, 256).
        tile_n = 512 if onehot_dtype == jnp.bfloat16 else 256
    chunk_t = min(chunk_t, t)
    assert t % chunk_t == 0 and chunk_t % 128 == 0 and t % 128 == 0
    n_pad = -(-n // tile_n) * tile_n
    x_t = jnp.zeros((d, n_pad), jnp.float32).at[:, :n].set(x.T.astype(jnp.float32))
    if table.dtype != jnp.bfloat16:
        # Callers should keep/maintain the table in bf16 (cast hoisted to init time);
        # this fallback keeps arbitrary-dtype inputs working.
        table = table.astype(jnp.bfloat16)

    kernel = functools.partial(_hashgrid_kernel, chunk_t=chunk_t, onehot_dtype=onehot_dtype)
    out = pl.pallas_call(
        kernel,
        out_shape=jax.ShapeDtypeStruct((l, f, n_pad), jnp.bfloat16),
        grid=(l, n_pad // tile_n),   # level outer: each level's table is DMA'd once
        in_specs=[
            pl.BlockSpec(memory_space=pltpu.MemorySpace.SMEM),      # per-level scale
            pl.BlockSpec(memory_space=pltpu.MemorySpace.SMEM),      # per-level resolution
            pl.BlockSpec(memory_space=pltpu.MemorySpace.SMEM),      # per-level hashmap size
            pl.BlockSpec(memory_space=pltpu.MemorySpace.SMEM),      # per-level hash-vs-dense flag
            pl.BlockSpec((d, tile_n), lambda lvl, i: (0, i)),       # positions tile
            pl.BlockSpec((1, f, t), lambda lvl, i: (lvl, 0, 0)),    # this level's table (bf16)
        ],
        out_specs=pl.BlockSpec((1, f, tile_n), lambda lvl, i: (lvl, 0, i)),
        scratch_shapes=[pltpu.VMEM((f, tile_n), jnp.float32)],      # f32 matmul accumulator
        compiler_params=pltpu.CompilerParams(
            # point-tile axis is uniform work -> let v7x megacore split it; the level axis is
            # ~32x load-imbalanced. Output blocks are disjoint either way (correctness-neutral
            # on single-TC v5e/v6e).
            dimension_semantics=("arbitrary", "parallel"),
            vmem_limit_bytes=32 * 1024 * 1024,
        ),
    )(jnp.asarray(scales), jnp.asarray(resolutions), jnp.asarray(hashmap_sizes),
      jnp.asarray(use_hash), x_t, table)

    # (L, F, Npad) -> (N, L*F): level-major then feature, like tinycudann.Encoding.
    out = jnp.transpose(out, (2, 0, 1)).reshape(n_pad, l * f)[:n]
    return out.astype(jnp.float16)   # tcnn Encoding returns half precision


# --------------------------- pure-numpy reference (for verification) -------------------------
def reference_encode(x, table, scales, resolutions, hashmap_sizes, use_hash):
    n = x.shape[0]
    l, f, _ = table.shape
    outs = []
    for lvl in range(l):
        scale = np.float32(scales[lvl])
        res = int(resolutions[lvl])
        hsize = int(hashmap_sizes[lvl])
        uh = int(use_hash[lvl])
        pos = x.astype(np.float32) * scale + np.float32(0.5)
        pos_floor = np.floor(pos)
        frac = pos - pos_floor
        cell = pos_floor.astype(np.int64)
        acc = np.zeros((n, f), np.float32)
        for corner in range(1 << N_POS_DIMS):
            weight = np.ones((n,), np.float32)
            dense_idx = np.zeros((n,), np.int64)
            hash_idx = np.zeros((n,), np.uint64)
            stride = 1
            for d in range(N_POS_DIMS):
                bit = (corner >> d) & 1
                coord = cell[:, d] + bit
                weight = weight * (frac[:, d] if bit else (np.float32(1.0) - frac[:, d]))
                dense_idx = dense_idx + coord * stride
                prod = (coord.astype(np.uint64) * np.uint64(_PRIMES[d])) & np.uint64(0xFFFFFFFF)
                hash_idx = hash_idx ^ prod
                stride *= res
            idx = (hash_idx % np.uint64(hsize)).astype(np.int64) if uh else dense_idx % hsize
            acc += weight[:, None] * np.take(table[lvl], idx, axis=1).T
        outs.append(acc)
    return np.concatenate(outs, axis=1).astype(np.float32)


# --------------------------- demo ------------------------------------------------------------
if __name__ == "__main__":
    # Small config consistent with the module's hyperparameters (scaled down so the padded
    # per-level table comfortably fits on chip; the kernel is generic in these sizes).
    n_pos_dims = 3
    n_levels = 8
    n_features_per_level = 2
    log2_hashmap_size = 12
    base_resolution = 4
    per_level_scale = 1.5
    n_points = 512

    scales, resolutions, hashmap_sizes, use_hash = make_level_params(
        n_levels, n_pos_dims, base_resolution, per_level_scale, log2_hashmap_size)
    T = 1 << log2_hashmap_size

    key = jax.random.PRNGKey(0)
    k_x, k_tab = jax.random.split(key)
    x = jax.random.uniform(k_x, (n_points, n_pos_dims), dtype=jnp.float32)
    # tcnn initializes the grid parameters ~ U(-1e-4, 1e-4); padded region is finite by
    # construction (NaN/Inf in padding would propagate through the 0-weight matmul rows).
    table = jax.random.uniform(k_tab, (n_levels, n_features_per_level, T),
                               dtype=jnp.float32, minval=-1e-4, maxval=1e-4)

    # Hoisted once-per-init cast: the encoder's parameters are kept in bf16.
    table_bf16 = jax.block_until_ready(table.astype(jnp.bfloat16))

    out = hashgrid_encode(x, table_bf16, scales, resolutions, hashmap_sizes, use_hash)
    out = jax.block_until_ready(out)

    assert out.shape == (n_points, n_levels * n_features_per_level)
    assert out.dtype == jnp.float16

    ref = reference_encode(np.asarray(x), np.asarray(table),
                           scales, resolutions, hashmap_sizes, use_hash)
    err = float(np.max(np.abs(np.asarray(out, dtype=np.float32) - ref)))
    assert err < 5e-5, f"max abs error {err}"

    print("KERNEL_OK")
</pallas_src>

<mosaic_0001>
module attributes {stable_mosaic.version = 11 : i64} {
  func.func @_hashgrid_kernel(%arg0: i32, %arg1: i32, %arg2: memref<8xf32, #tpu.memory_space<smem>>, %arg3: memref<8xi32, #tpu.memory_space<smem>>, %arg4: memref<8xi32, #tpu.memory_space<smem>>, %arg5: memref<8xi32, #tpu.memory_space<smem>>, %arg6: memref<3x256xf32, #tpu.memory_space<vmem>>, %arg7: memref<1x2x4096xbf16, #tpu.memory_space<vmem>>, %arg8: memref<1x2x256xbf16, #tpu.memory_space<vmem>>, %arg9: memref<2x256xf32, #tpu.memory_space<vmem>>) attributes {dimension_semantics = [#tpu.dimension_semantics<arbitrary>, #tpu.dimension_semantics<parallel>], iteration_bounds = array<i64: 8, 2>, scalar_prefetch = 0 : i64, scratch_operands = 1 : i64, tpu.core_type = #tpu.core_type<tc>, window_params = [{transform_indices = @transform_0, window_bounds = array<i64: 8>}, {transform_indices = @transform_1, window_bounds = array<i64: 8>}, {transform_indices = @transform_2, window_bounds = array<i64: 8>}, {transform_indices = @transform_3, window_bounds = array<i64: 8>}, {transform_indices = @transform_4, window_bounds = array<i64: 3, 256>}, {transform_indices = @transform_5, window_bounds = array<i64: 1, 2, 4096>}, {transform_indices = @transform_6, window_bounds = array<i64: 1, 2, 256>}]} {
    %0 = arith.index_cast %arg0 : i32 to index
    %1 = memref.load %arg2[%0] : memref<8xf32, #tpu.memory_space<smem>>
    %2 = arith.index_cast %arg0 : i32 to index
    %3 = memref.load %arg3[%2] : memref<8xi32, #tpu.memory_space<smem>>
    %4 = arith.index_cast %arg0 : i32 to index
    %5 = memref.load %arg4[%4] : memref<8xi32, #tpu.memory_space<smem>>
    %6 = arith.index_cast %arg0 : i32 to index
    %7 = memref.load %arg5[%6] : memref<8xi32, #tpu.memory_space<smem>>
    %c0 = arith.constant 0 : index
    %c0_0 = arith.constant 0 : index
    %8 = vector.load %arg6[%c0, %c0_0] : memref<3x256xf32, #tpu.memory_space<vmem>>, vector<3x256xf32>
    %9 = vector.broadcast %1 : f32 to vector<3x256xf32>
    %10 = arith.mulf %8, %9 : vector<3x256xf32>
    %cst = arith.constant 5.000000e-01 : f32
    %11 = vector.broadcast %cst : f32 to vector<3x256xf32>
    %12 = arith.addf %10, %11 : vector<3x256xf32>
    %13 = math.floor %12 : vector<3x256xf32>
    %14 = arith.subf %12, %13 : vector<3x256xf32>
    %15 = arith.fptosi %13 : vector<3x256xf32> to vector<3x256xi32>
    %16 = vector.extract_strided_slice %14 {offsets = [0, 0], sizes = [1, 256], strides = [1, 1]} : vector<3x256xf32> to vector<1x256xf32>
    %17 = vector.extract_strided_slice %14 {offsets = [1, 0], sizes = [1, 256], strides = [1, 1]} : vector<3x256xf32> to vector<1x256xf32>
    %18 = vector.extract_strided_slice %14 {offsets = [2, 0], sizes = [1, 256], strides = [1, 1]} : vector<3x256xf32> to vector<1x256xf32>
    %19 = vector.extract_strided_slice %15 {offsets = [0, 0], sizes = [1, 256], strides = [1, 1]} : vector<3x256xi32> to vector<1x256xi32>
    %20 = vector.extract_strided_slice %15 {offsets = [1, 0], sizes = [1, 256], strides = [1, 1]} : vector<3x256xi32> to vector<1x256xi32>
    %21 = vector.extract_strided_slice %15 {offsets = [2, 0], sizes = [1, 256], strides = [1, 1]} : vector<3x256xi32> to vector<1x256xi32>
    %22 = arith.muli %3, %3 : i32
    %c1_i32 = arith.constant 1 : i32
    %23 = arith.subi %5, %c1_i32 : i32
    %cst_1 = arith.constant 1.000000e+00 : f32
    %24 = vector.broadcast %cst_1 : f32 to vector<1x256xf32>
    %c0_i32 = arith.constant 0 : i32
    %25 = vector.broadcast %c0_i32 : i32 to vector<1x256xi32>
    %c0_i32_2 = arith.constant 0 : i32
    %26 = vector.broadcast %c0_i32_2 : i32 to vector<1x256xi32>
    %c0_i32_3 = arith.constant 0 : i32
    %27 = vector.broadcast %c0_i32_3 : i32 to vector<1x256xi32>
    %28 = arith.addi %19, %27 : vector<1x256xi32>
    %cst_4 = arith.constant 1.000000e+00 : f32
    %29 = vector.broadcast %cst_4 : f32 to vector<1x256xf32>
    %30 = arith.subf %29, %16 : vector<1x256xf32>
    %31 = arith.mulf %24, %30 : vector<1x256xf32>
    %c1_i32_5 = arith.constant 1 : i32
    %32 = vector.broadcast %c1_i32_5 : i32 to vector<1x256xi32>
    %33 = arith.muli %28, %32 : vector<1x256xi32>
    %34 = arith.addi %25, %33 : vector<1x256xi32>
    %c1_i32_6 = arith.constant 1 : i32
    %35 = vector.broadcast %c1_i32_6 : i32 to vector<1x256xi32>
    %36 = arith.muli %28, %35 : vector<1x256xi32>
    %37 = arith.xori %26, %36 : vector<1x256xi32>
    %c0_i32_7 = arith.constant 0 : i32
    %38 = vector.broadcast %c0_i32_7 : i32 to vector<1x256xi32>
    %39 = arith.addi %20, %38 : vector<1x256xi32>
    %cst_8 = arith.constant 1.000000e+00 : f32
    %40 = vector.broadcast %cst_8 : f32 to vector<1x256xf32>
    %41 = arith.subf %40, %17 : vector<1x256xf32>
    %42 = arith.mulf %31, %41 : vector<1x256xf32>
    %43 = vector.broadcast %3 : i32 to vector<1x256xi32>
    %44 = arith.muli %39, %43 : vector<1x256xi32>
    %45 = arith.addi %34, %44 : vector<1x256xi32>
    %c-1640531535_i32 = arith.constant -1640531535 : i32
    %46 = vector.broadcast %c-1640531535_i32 : i32 to vector<1x256xi32>
    %47 = arith.muli %39, %46 : vector<1x256xi32>
    %48 = arith.xori %37, %47 : vector<1x256xi32>
    %c0_i32_9 = arith.constant 0 : i32
    %49 = vector.broadcast %c0_i32_9 : i32 to vector<1x256xi32>
    %50 = arith.addi %21, %49 : vector<1x256xi32>
    %cst_10 = arith.constant 1.000000e+00 : f32
    %51 = vector.broadcast %cst_10 : f32 to vector<1x256xf32>
    %52 = arith.subf %51, %18 : vector<1x256xf32>
    %53 = arith.mulf %42, %52 : vector<1x256xf32>
    %54 = vector.broadcast %22 : i32 to vector<1x256xi32>
    %55 = arith.muli %50, %54 : vector<1x256xi32>
    %56 = arith.addi %45, %55 : vector<1x256xi32>
    %c805459861_i32 = arith.constant 805459861 : i32
    %57 = vector.broadcast %c805459861_i32 : i32 to vector<1x256xi32>
    %58 = arith.muli %50, %57 : vector<1x256xi32>
    %59 = arith.xori %48, %58 : vector<1x256xi32>
    %60 = vector.broadcast %5 : i32 to vector<1x256xi32>
    %61 = arith.cmpi sge, %56, %60 : vector<1x256xi32>
    %62 = vector.broadcast %5 : i32 to vector<1x256xi32>
    %63 = arith.subi %56, %62 : vector<1x256xi32>
    %64 = arith.select %61, %63, %56 : vector<1x256xi1>, vector<1x256xi32>
    %65 = vector.broadcast %23 : i32 to vector<1x256xi32>
    %66 = arith.andi %59, %65 : vector<1x256xi32>
    %c0_i32_11 = arith.constant 0 : i32
    %67 = arith.cmpi ne, %7, %c0_i32_11 : i32
    %68 = arith.select %67, %66, %64 : vector<1x256xi32>
    %cst_12 = arith.constant 1.000000e+00 : f32
    %69 = vector.broadcast %cst_12 : f32 to vector<1x256xf32>
    %c0_i32_13 = arith.constant 0 : i32
    %70 = vector.broadcast %c0_i32_13 : i32 to vector<1x256xi32>
    %c0_i32_14 = arith.constant 0 : i32
    %71 = vector.broadcast %c0_i32_14 : i32 to vector<1x256xi32>
    %c1_i32_15 = arith.constant 1 : i32
    %72 = vector.broadcast %c1_i32_15 : i32 to vector<1x256xi32>
    %73 = arith.addi %19, %72 : vector<1x256xi32>
    %74 = arith.mulf %69, %16 : vector<1x256xf32>
    %c1_i32_16 = arith.constant 1 : i32
    %75 = vector.broadcast %c1_i32_16 : i32 to vector<1x256xi32>
    %76 = arith.muli %73, %75 : vector<1x256xi32>
    %77 = arith.addi %70, %76 : vector<1x256xi32>
    %c1_i32_17 = arith.constant 1 : i32
    %78 = vector.broadcast %c1_i32_17 : i32 to vector<1x256xi32>
    %79 = arith.muli %73, %78 : vector<1x256xi32>
    %80 = arith.xori %71, %79 : vector<1x256xi32>
    %c0_i32_18 = arith.constant 0 : i32
    %81 = vector.broadcast %c0_i32_18 : i32 to vector<1x256xi32>
    %82 = arith.addi %20, %81 : vector<1x256xi32>
    %cst_19 = arith.constant 1.000000e+00 : f32
    %83 = vector.broadcast %cst_19 : f32 to vector<1x256xf32>
    %84 = arith.subf %83, %17 : vector<1x256xf32>
    %85 = arith.mulf %74, %84 : vector<1x256xf32>
    %86 = vector.broadcast %3 : i32 to vector<1x256xi32>
    %87 = arith.muli %82, %86 : vector<1x256xi32>
    %88 = arith.addi %77, %87 : vector<1x256xi32>
    %c-1640531535_i32_20 = arith.constant -1640531535 : i32
    %89 = vector.broadcast %c-1640531535_i32_20 : i32 to vector<1x256xi32>
    %90 = arith.muli %82, %89 : vector<1x256xi32>
    %91 = arith.xori %80, %90 : vector<1x256xi32>
    %c0_i32_21 = arith.constant 0 : i32
    %92 = vector.broadcast %c0_i32_21 : i32 to vector<1x256xi32>
    %93 = arith.addi %21, %92 : vector<1x256xi32>
    %cst_22 = arith.constant 1.000000e+00 : f32
    %94 = vector.broadcast %cst_22 : f32 to vector<1x256xf32>
    %95 = arith.subf %94, %18 : vector<1x256xf32>
    %96 = arith.mulf %85, %95 : vector<1x256xf32>
    %97 = vector.broadcast %22 : i32 to vector<1x256xi32>
    %98 = arith.muli %93, %97 : vector<1x256xi32>
    %99 = arith.addi %88, %98 : vector<1x256xi32>
    %c805459861_i32_23 = arith.constant 805459861 : i32
    %100 = vector.broadcast %c805459861_i32_23 : i32 to vector<1x256xi32>
    %101 = arith.muli %93, %100 : vector<1x256xi32>
    %102 = arith.xori %91, %101 : vector<1x256xi32>
    %103 = vector.broadcast %5 : i32 to vector<1x256xi32>
    %104 = arith.cmpi sge, %99, %103 : vector<1x256xi32>
    %105 = vector.broadcast %5 : i32 to vector<1x256xi32>
    %106 = arith.subi %99, %105 : vector<1x256xi32>
    %107 = arith.select %104, %106, %99 : vector<1x256xi1>, vector<1x256xi32>
    %108 = vector.broadcast %23 : i32 to vector<1x256xi32>
    %109 = arith.andi %102, %108 : vector<1x256xi32>
    %c0_i32_24 = arith.constant 0 : i32
    %110 = arith.cmpi ne, %7, %c0_i32_24 : i32
    %111 = arith.select %110, %109, %107 : vector<1x256xi32>
    %cst_25 = arith.constant 1.000000e+00 : f32
    %112 = vector.broadcast %cst_25 : f32 to vector<1x256xf32>
    %c0_i32_26 = arith.constant 0 : i32
    %113 = vector.broadcast %c0_i32_26 : i32 to vector<1x256xi32>
    %c0_i32_27 = arith.constant 0 : i32
    %114 = vector.broadcast %c0_i32_27 : i32 to vector<1x256xi32>
    %c0_i32_28 = arith.constant 0 : i32
    %115 = vector.broadcast %c0_i32_28 : i32 to vector<1x256xi32>
    %116 = arith.addi %19, %115 : vector<1x256xi32>
    %cst_29 = arith.constant 1.000000e+00 : f32
    %117 = vector.broadcast %cst_29 : f32 to vector<1x256xf32>
    %118 = arith.subf %117, %16 : vector<1x256xf32>
    %119 = arith.mulf %112, %118 : vector<1x256xf32>
    %c1_i32_30 = arith.constant 1 : i32
    %120 = vector.broadcast %c1_i32_30 : i32 to vector<1x256xi32>
    %121 = arith.muli %116, %120 : vector<1x256xi32>
    %122 = arith.addi %113, %121 : vector<1x256xi32>
    %c1_i32_31 = arith.constant 1 : i32
    %123 = vector.broadcast %c1_i32_31 : i32 to vector<1x256xi32>
    %124 = arith.muli %116, %123 : vector<1x256xi32>
    %125 = arith.xori %114, %124 : vector<1x256xi32>
    %c1_i32_32 = arith.constant 1 : i32
    %126 = vector.broadcast %c1_i32_32 : i32 to vector<1x256xi32>
    %127 = arith.addi %20, %126 : vector<1x256xi32>
    %128 = arith.mulf %119, %17 : vector<1x256xf32>
    %129 = vector.broadcast %3 : i32 to vector<1x256xi32>
    %130 = arith.muli %127, %129 : vector<1x256xi32>
    %131 = arith.addi %122, %130 : vector<1x256xi32>
    %c-1640531535_i32_33 = arith.constant -1640531535 : i32
    %132 = vector.broadcast %c-1640531535_i32_33 : i32 to vector<1x256xi32>
    %133 = arith.muli %127, %132 : vector<1x256xi32>
    %134 = arith.xori %125, %133 : vector<1x256xi32>
    %c0_i32_34 = arith.constant 0 : i32
    %135 = vector.broadcast %c0_i32_34 : i32 to vector<1x256xi32>
    %136 = arith.addi %21, %135 : vector<1x256xi32>
    %cst_35 = arith.constant 1.000000e+00 : f32
    %137 = vector.broadcast %cst_35 : f32 to vector<1x256xf32>
    %138 = arith.subf %137, %18 : vector<1x256xf32>
    %139 = arith.mulf %128, %138 : vector<1x256xf32>
    %140 = vector.broadcast %22 : i32 to vector<1x256xi32>
    %141 = arith.muli %136, %140 : vector<1x256xi32>
    %142 = arith.addi %131, %141 : vector<1x256xi32>
    %c805459861_i32_36 = arith.constant 805459861 : i32
    %143 = vector.broadcast %c805459861_i32_36 : i32 to vector<1x256xi32>
    %144 = arith.muli %136, %143 : vector<1x256xi32>
    %145 = arith.xori %134, %144 : vector<1x256xi32>
    %146 = vector.broadcast %5 : i32 to vector<1x256xi32>
    %147 = arith.cmpi sge, %142, %146 : vector<1x256xi32>
    %148 = vector.broadcast %5 : i32 to vector<1x256xi32>
    %149 = arith.subi %142, %148 : vector<1x256xi32>
    %150 = arith.select %147, %149, %142 : vector<1x256xi1>, vector<1x256xi32>
    %151 = vector.broadcast %23 : i32 to vector<1x256xi32>
    %152 = arith.andi %145, %151 : vector<1x256xi32>
    %c0_i32_37 = arith.constant 0 : i32
    %153 = arith.cmpi ne, %7, %c0_i32_37 : i32
    %154 = arith.select %153, %152, %150 : vector<1x256xi32>
    %cst_38 = arith.constant 1.000000e+00 : f32
    %155 = vector.broadcast %cst_38 : f32 to vector<1x256xf32>
    %c0_i32_39 = arith.constant 0 : i32
    %156 = vector.broadcast %c0_i32_39 : i32 to vector<1x256xi32>
    %c0_i32_40 = arith.constant 0 : i32
    %157 = vector.broadcast %c0_i32_40 : i32 to vector<1x256xi32>
    %c1_i32_41 = arith.constant 1 : i32
    %158 = vector.broadcast %c1_i32_41 : i32 to vector<1x256xi32>
    %159 = arith.addi %19, %158 : vector<1x256xi32>
    %160 = arith.mulf %155, %16 : vector<1x256xf32>
    %c1_i32_42 = arith.constant 1 : i32
    %161 = vector.broadcast %c1_i32_42 : i32 to vector<1x256xi32>
    %162 = arith.muli %159, %161 : vector<1x256xi32>
    %163 = arith.addi %156, %162 : vector<1x256xi32>
    %c1_i32_43 = arith.constant 1 : i32
    %164 = vector.broadcast %c1_i32_43 : i32 to vector<1x256xi32>
    %165 = arith.muli %159, %164 : vector<1x256xi32>
    %166 = arith.xori %157, %165 : vector<1x256xi32>
    %c1_i32_44 = arith.constant 1 : i32
    %167 = vector.broadcast %c1_i32_44 : i32 to vector<1x256xi32>
    %168 = arith.addi %20, %167 : vector<1x256xi32>
    %169 = arith.mulf %160, %17 : vector<1x256xf32>
    %170 = vector.broadcast %3 : i32 to vector<1x256xi32>
    %171 = arith.muli %168, %170 : vector<1x256xi32>
    %172 = arith.addi %163, %171 : vector<1x256xi32>
    %c-1640531535_i32_45 = arith.constant -1640531535 : i32
    %173 = vector.broadcast %c-1640531535_i32_45 : i32 to vector<1x256xi32>
    %174 = arith.muli %168, %173 : vector<1x256xi32>
    %175 = arith.xori %166, %174 : vector<1x256xi32>
    %c0_i32_46 = arith.constant 0 : i32
    %176 = vector.broadcast %c0_i32_46 : i32 to vector<1x256xi32>
    %177 = arith.addi %21, %176 : vector<1x256xi32>
    %cst_47 = arith.constant 1.000000e+00 : f32
    %178 = vector.broadcast %cst_47 : f32 to vector<1x256xf32>
    %179 = arith.subf %178, %18 : vector<1x256xf32>
    %180 = arith.mulf %169, %179 : vector<1x256xf32>
    %181 = vector.broadcast %22 : i32 to vector<1x256xi32>
    %182 = arith.muli %177, %181 : vector<1x256xi32>
    %183 = arith.addi %172, %182 : vector<1x256xi32>
    %c805459861_i32_48 = arith.constant 805459861 : i32
    %184 = vector.broadcast %c805459861_i32_48 : i32 to vector<1x256xi32>
    %185 = arith.muli %177, %184 : vector<1x256xi32>
    %186 = arith.xori %175, %185 : vector<1x256xi32>
    %187 = vector.broadcast %5 : i32 to vector<1x256xi32>
    %188 = arith.cmpi sge, %183, %187 : vector<1x256xi32>
    %189 = vector.broadcast %5 : i32 to vector<1x256xi32>
    %190 = arith.subi %183, %189 : vector<1x256xi32>
    %191 = arith.select %188, %190, %183 : vector<1x256xi1>, vector<1x256xi32>
    %192 = vector.broadcast %23 : i32 to vector<1x256xi32>
    %193 = arith.andi %186, %192 : vector<1x256xi32>
    %c0_i32_49 = arith.constant 0 : i32
    %194 = arith.cmpi ne, %7, %c0_i32_49 : i32
    %195 = arith.select %194, %193, %191 : vector<1x256xi32>
    %cst_50 = arith.constant 1.000000e+00 : f32
    %196 = vector.broadcast %cst_50 : f32 to vector<1x256xf32>
    %c0_i32_51 = arith.constant 0 : i32
    %197 = vector.broadcast %c0_i32_51 : i32 to vector<1x256xi32>
    %c0_i32_52 = arith.constant 0 : i32
    %198 = vector.broadcast %c0_i32_52 : i32 to vector<1x256xi32>
    %c0_i32_53 = arith.constant 0 : i32
    %199 = vector.broadcast %c0_i32_53 : i32 to vector<1x256xi32>
    %200 = arith.addi %19, %199 : vector<1x256xi32>
    %cst_54 = arith.constant 1.000000e+00 : f32
    %201 = vector.broadcast %cst_54 : f32 to vector<1x256xf32>
    %202 = arith.subf %201, %16 : vector<1x256xf32>
    %203 = arith.mulf %196, %202 : vector<1x256xf32>
    %c1_i32_55 = arith.constant 1 : i32
    %204 = vector.broadcast %c1_i32_55 : i32 to vector<1x256xi32>
    %205 = arith.muli %200, %204 : vector<1x256xi32>
    %206 = arith.addi %197, %205 : vector<1x256xi32>
    %c1_i32_56 = arith.constant 1 : i32
    %207 = vector.broadcast %c1_i32_56 : i32 to vector<1x256xi32>
    %208 = arith.muli %200, %207 : vector<1x256xi32>
    %209 = arith.xori %198, %208 : vector<1x256xi32>
    %c0_i32_57 = arith.constant 0 : i32
    %210 = vector.broadcast %c0_i32_57 : i32 to vector<1x256xi32>
    %211 = arith.addi %20, %210 : vector<1x256xi32>
    %cst_58 = arith.constant 1.000000e+00 : f32
    %212 = vector.broadcast %cst_58 : f32 to vector<1x256xf32>
    %213 = arith.subf %212, %17 : vector<1x256xf32>
    %214 = arith.mulf %203, %213 : vector<1x256xf32>
    %215 = vector.broadcast %3 : i32 to vector<1x256xi32>
    %216 = arith.muli %211, %215 : vector<1x256xi32>
    %217 = arith.addi %206, %216 : vector<1x256xi32>
    %c-1640531535_i32_59 = arith.constant -1640531535 : i32
    %218 = vector.broadcast %c-1640531535_i32_59 : i32 to vector<1x256xi32>
    %219 = arith.muli %211, %218 : vector<1x256xi32>
    %220 = arith.xori %209, %219 : vector<1x256xi32>
    %c1_i32_60 = arith.constant 1 : i32
    %221 = vector.broadcast %c1_i32_60 : i32 to vector<1x256xi32>
    %222 = arith.addi %21, %221 : vector<1x256xi32>
    %223 = arith.mulf %214, %18 : vector<1x256xf32>
    %224 = vector.broadcast %22 : i32 to vector<1x256xi32>
    %225 = arith.muli %222, %224 : vector<1x256xi32>
    %226 = arith.addi %217, %225 : vector<1x256xi32>
    %c805459861_i32_61 = arith.constant 805459861 : i32
    %227 = vector.broadcast %c805459861_i32_61 : i32 to vector<1x256xi32>
    %228 = arith.muli %222, %227 : vector<1x256xi32>
    %229 = arith.xori %220, %228 : vector<1x256xi32>
    %230 = vector.broadcast %5 : i32 to vector<1x256xi32>
    %231 = arith.cmpi sge, %226, %230 : vector<1x256xi32>
    %232 = vector.broadcast %5 : i32 to vector<1x256xi32>
    %233 = arith.subi %226, %232 : vector<1x256xi32>
    %234 = arith.select %231, %233, %226 : vector<1x256xi1>, vector<1x256xi32>
    %235 = vector.broadcast %23 : i32 to vector<1x256xi32>
    %236 = arith.andi %229, %235 : vector<1x256xi32>
    %c0_i32_62 = arith.constant 0 : i32
    %237 = arith.cmpi ne, %7, %c0_i32_62 : i32
    %238 = arith.select %237, %236, %234 : vector<1x256xi32>
    %cst_63 = arith.constant 1.000000e+00 : f32
    %239 = vector.broadcast %cst_63 : f32 to vector<1x256xf32>
    %c0_i32_64 = arith.constant 0 : i32
    %240 = vector.broadcast %c0_i32_64 : i32 to vector<1x256xi32>
    %c0_i32_65 = arith.constant 0 : i32
    %241 = vector.broadcast %c0_i32_65 : i32 to vector<1x256xi32>
    %c1_i32_66 = arith.constant 1 : i32
    %242 = vector.broadcast %c1_i32_66 : i32 to vector<1x256xi32>
    %243 = arith.addi %19, %242 : vector<1x256xi32>
    %244 = arith.mulf %239, %16 : vector<1x256xf32>
    %c1_i32_67 = arith.constant 1 : i32
    %245 = vector.broadcast %c1_i32_67 : i32 to vector<1x256xi32>
    %246 = arith.muli %243, %245 : vector<1x256xi32>
    %247 = arith.addi %240, %246 : vector<1x256xi32>
    %c1_i32_68 = arith.constant 1 : i32
    %248 = vector.broadcast %c1_i32_68 : i32 to vector<1x256xi32>
    %249 = arith.muli %243, %248 : vector<1x256xi32>
    %250 = arith.xori %241, %249 : vector<1x256xi32>
    %c0_i32_69 = arith.constant 0 : i32
    %251 = vector.broadcast %c0_i32_69 : i32 to vector<1x256xi32>
    %252 = arith.addi %20, %251 : vector<1x256xi32>
    %cst_70 = arith.constant 1.000000e+00 : f32
    %253 = vector.broadcast %cst_70 : f32 to vector<1x256xf32>
    %254 = arith.subf %253, %17 : vector<1x256xf32>
    %255 = arith.mulf %244, %254 : vector<1x256xf32>
    %256 = vector.broadcast %3 : i32 to vector<1x256xi32>
    %257 = arith.muli %252, %256 : vector<1x256xi32>
    %258 = arith.addi %247, %257 : vector<1x256xi32>
    %c-1640531535_i32_71 = arith.constant -1640531535 : i32
    %259 = vector.broadcast %c-1640531535_i32_71 : i32 to vector<1x256xi32>
    %260 = arith.muli %252, %259 : vector<1x256xi32>
    %261 = arith.xori %250, %260 : vector<1x256xi32>
    %c1_i32_72 = arith.constant 1 : i32
    %262 = vector.broadcast %c1_i32_72 : i32 to vector<1x256xi32>
    %263 = arith.addi %21, %262 : vector<1x256xi32>
    %264 = arith.mulf %255, %18 : vector<1x256xf32>
    %265 = vector.broadcast %22 : i32 to vector<1x256xi32>
    %266 = arith.muli %263, %265 : vector<1x256xi32>
    %267 = arith.addi %258, %266 : vector<1x256xi32>
    %c805459861_i32_73 = arith.constant 805459861 : i32
    %268 = vector.broadcast %c805459861_i32_73 : i32 to vector<1x256xi32>
    %269 = arith.muli %263, %268 : vector<1x256xi32>
    %270 = arith.xori %261, %269 : vector<1x256xi32>
    %271 = vector.broadcast %5 : i32 to vector<1x256xi32>
    %272 = arith.cmpi sge, %267, %271 : vector<1x256xi32>
    %273 = vector.broadcast %5 : i32 to vector<1x256xi32>
    %274 = arith.subi %267, %273 : vector<1x256xi32>
    %275 = arith.select %272, %274, %267 : vector<1x256xi1>, vector<1x256xi32>
    %276 = vector.broadcast %23 : i32 to vector<1x256xi32>
    %277 = arith.andi %270, %276 : vector<1x256xi32>
    %c0_i32_74 = arith.constant 0 : i32
    %278 = arith.cmpi ne, %7, %c0_i32_74 : i32
    %279 = arith.select %278, %277, %275 : vector<1x256xi32>
    %cst_75 = arith.constant 1.000000e+00 : f32
    %280 = vector.broadcast %cst_75 : f32 to vector<1x256xf32>
    %c0_i32_76 = arith.constant 0 : i32
    %281 = vector.broadcast %c0_i32_76 : i32 to vector<1x256xi32>
    %c0_i32_77 = arith.constant 0 : i32
    %282 = vector.broadcast %c0_i32_77 : i32 to vector<1x256xi32>
    %c0_i32_78 = arith.constant 0 : i32
    %283 = vector.broadcast %c0_i32_78 : i32 to vector<1x256xi32>
    %284 = arith.addi %19, %283 : vector<1x256xi32>
    %cst_79 = arith.constant 1.000000e+00 : f32
    %285 = vector.broadcast %cst_79 : f32 to vector<1x256xf32>
    %286 = arith.subf %285, %16 : vector<1x256xf32>
    %287 = arith.mulf %280, %286 : vector<1x256xf32>
    %c1_i32_80 = arith.constant 1 : i32
    %288 = vector.broadcast %c1_i32_80 : i32 to vector<1x256xi32>
    %289 = arith.muli %284, %288 : vector<1x256xi32>
    %290 = arith.addi %281, %289 : vector<1x256xi32>
    %c1_i32_81 = arith.constant 1 : i32
    %291 = vector.broadcast %c1_i32_81 : i32 to vector<1x256xi32>
    %292 = arith.muli %284, %291 : vector<1x256xi32>
    %293 = arith.xori %282, %292 : vector<1x256xi32>
    %c1_i32_82 = arith.constant 1 : i32
    %294 = vector.broadcast %c1_i32_82 : i32 to vector<1x256xi32>
    %295 = arith.addi %20, %294 : vector<1x256xi32>
    %296 = arith.mulf %287, %17 : vector<1x256xf32>
    %297 = vector.broadcast %3 : i32 to vector<1x256xi32>
    %298 = arith.muli %295, %297 : vector<1x256xi32>
    %299 = arith.addi %290, %298 : vector<1x256xi32>
    %c-1640531535_i32_83 = arith.constant -1640531535 : i32
    %300 = vector.broadcast %c-1640531535_i32_83 : i32 to vector<1x256xi32>
    %301 = arith.muli %295, %300 : vector<1x256xi32>
    %302 = arith.xori %293, %301 : vector<1x256xi32>
    %c1_i32_84 = arith.constant 1 : i32
    %303 = vector.broadcast %c1_i32_84 : i32 to vector<1x256xi32>
    %304 = arith.addi %21, %303 : vector<1x256xi32>
    %305 = arith.mulf %296, %18 : vector<1x256xf32>
    %306 = vector.broadcast %22 : i32 to vector<1x256xi32>
    %307 = arith.muli %304, %306 : vector<1x256xi32>
    %308 = arith.addi %299, %307 : vector<1x256xi32>
    %c805459861_i32_85 = arith.constant 805459861 : i32
    %309 = vector.broadcast %c805459861_i32_85 : i32 to vector<1x256xi32>
    %310 = arith.muli %304, %309 : vector<1x256xi32>
    %311 = arith.xori %302, %310 : vector<1x256xi32>
    %312 = vector.broadcast %5 : i32 to vector<1x256xi32>
    %313 = arith.cmpi sge, %308, %312 : vector<1x256xi32>
    %314 = vector.broadcast %5 : i32 to vector<1x256xi32>
    %315 = arith.subi %308, %314 : vector<1x256xi32>
    %316 = arith.select %313, %315, %308 : vector<1x256xi1>, vector<1x256xi32>
    %317 = vector.broadcast %23 : i32 to vector<1x256xi32>
    %318 = arith.andi %311, %317 : vector<1x256xi32>
    %c0_i32_86 = arith.constant 0 : i32
    %319 = arith.cmpi ne, %7, %c0_i32_86 : i32
    %320 = arith.select %319, %318, %316 : vector<1x256xi32>
    %cst_87 = arith.constant 1.000000e+00 : f32
    %321 = vector.broadcast %cst_87 : f32 to vector<1x256xf32>
    %c0_i32_88 = arith.constant 0 : i32
    %322 = vector.broadcast %c0_i32_88 : i32 to vector<1x256xi32>
    %c0_i32_89 = arith.constant 0 : i32
    %323 = vector.broadcast %c0_i32_89 : i32 to vector<1x256xi32>
    %c1_i32_90 = arith.constant 1 : i32
    %324 = vector.broadcast %c1_i32_90 : i32 to vector<1x256xi32>
    %325 = arith.addi %19, %324 : vector<1x256xi32>
    %326 = arith.mulf %321, %16 : vector<1x256xf32>
    %c1_i32_91 = arith.constant 1 : i32
    %327 = vector.broadcast %c1_i32_91 : i32 to vector<1x256xi32>
    %328 = arith.muli %325, %327 : vector<1x256xi32>
    %329 = arith.addi %322, %328 : vector<1x256xi32>
    %c1_i32_92 = arith.constant 1 : i32
    %330 = vector.broadcast %c1_i32_92 : i32 to vector<1x256xi32>
    %331 = arith.muli %325, %330 : vector<1x256xi32>
    %332 = arith.xori %323, %331 : vector<1x256xi32>
    %c1_i32_93 = arith.constant 1 : i32
    %333 = vector.broadcast %c1_i32_93 : i32 to vector<1x256xi32>
    %334 = arith.addi %20, %333 : vector<1x256xi32>
    %335 = arith.mulf %326, %17 : vector<1x256xf32>
    %336 = vector.broadcast %3 : i32 to vector<1x256xi32>
    %337 = arith.muli %334, %336 : vector<1x256xi32>
    %338 = arith.addi %329, %337 : vector<1x256xi32>
    %c-1640531535_i32_94 = arith.constant -1640531535 : i32
    %339 = vector.broadcast %c-1640531535_i32_94 : i32 to vector<1x256xi32>
    %340 = arith.muli %334, %339 : vector<1x256xi32>
    %341 = arith.xori %332, %340 : vector<1x256xi32>
    %c1_i32_95 = arith.constant 1 : i32
    %342 = vector.broadcast %c1_i32_95 : i32 to vector<1x256xi32>
    %343 = arith.addi %21, %342 : vector<1x256xi32>
    %344 = arith.mulf %335, %18 : vector<1x256xf32>
    %345 = vector.broadcast %22 : i32 to vector<1x256xi32>
    %346 = arith.muli %343, %345 : vector<1x256xi32>
    %347 = arith.addi %338, %346 : vector<1x256xi32>
    %c805459861_i32_96 = arith.constant 805459861 : i32
    %348 = vector.broadcast %c805459861_i32_96 : i32 to vector<1x256xi32>
    %349 = arith.muli %343, %348 : vector<1x256xi32>
    %350 = arith.xori %341, %349 : vector<1x256xi32>
    %351 = vector.broadcast %5 : i32 to vector<1x256xi32>
    %352 = arith.cmpi sge, %347, %351 : vector<1x256xi32>
    %353 = vector.broadcast %5 : i32 to vector<1x256xi32>
    %354 = arith.subi %347, %353 : vector<1x256xi32>
    %355 = arith.select %352, %354, %347 : vector<1x256xi1>, vector<1x256xi32>
    %356 = vector.broadcast %23 : i32 to vector<1x256xi32>
    %357 = arith.andi %350, %356 : vector<1x256xi32>
    %c0_i32_97 = arith.constant 0 : i32
    %358 = arith.cmpi ne, %7, %c0_i32_97 : i32
    %359 = arith.select %358, %357, %355 : vector<1x256xi32>
    %360 = tpu.iota {dimensions = array<i32: 0>} : vector<128x1xi32>
    %cst_98 = arith.constant 0.000000e+00 : f32
    %361 = vector.broadcast %cst_98 : f32 to vector<2x256xf32>
    %c0_99 = arith.constant 0 : index
    %c0_100 = arith.constant 0 : index
    %362 = vector.load %arg9[%c0_99, %c0_100] : memref<2x256xf32, #tpu.memory_space<vmem>>, vector<2x256xf32>
    tpu.vector_store %arg9[%c0_99, %c0_100], %361 {strides = array<i32>} : memref<2x256xf32, #tpu.memory_space<vmem>>, vector<2x256xf32>,
    %c127_i32 = arith.constant 127 : i32
    %363 = arith.addi %5, %c127_i32 : i32
    %c128_i32 = arith.constant 128 : i32
    %364 = arith.divsi %363, %c128_i32 : i32
    %c0_i32_101 = arith.constant 0 : i32
    %365 = arith.subi %364, %c0_i32_101 : i32
    %c1_i32_102 = arith.constant 1 : i32
    %c1_i32_103 = arith.constant 1 : i32
    %366 = arith.subi %c1_i32_102, %c1_i32_103 : i32
    %367 = arith.addi %365, %366 : i32
    %c1_i32_104 = arith.constant 1 : i32
    %368 = arith.divsi %367, %c1_i32_104 : i32
    %c1_i32_105 = arith.constant 1 : i32
    %c0_i32_106 = arith.constant 0 : i32
    %cst_107 = arith.constant 0.000000e+00 : f32
    %c0_i32_108 = arith.constant 0 : i32
    %369 = arith.subi %368, %c0_i32_108 : i32
    %370 = arith.addi %c0_i32_108, %369 : i32
    %c1_i32_109 = arith.constant 1 : i32
    scf.for %arg10 = %c0_i32_108 to %370 step %c1_i32_109  : i32 {
      %376 = arith.muli %arg10, %c1_i32_105 : i32
      %377 = arith.addi %c0_i32_106, %376 : i32
      %c128_i32_115 = arith.constant 128 : i32
      %378 = arith.muli %377, %c128_i32_115 : i32
      %379 = tpu.assume_multiple %378, 128 : i32
      %380 = vector.broadcast %379 : i32 to vector<1x256xi32>
      %381 = arith.subi %68, %380 : vector<1x256xi32>
      %382 = vector.broadcast %360 : vector<128x1xi32> to vector<128x256xi32>
      %383 = vector.broadcast %381 : vector<1x256xi32> to vector<128x256xi32>
      %384 = arith.cmpi eq, %382, %383 : vector<128x256xi32>
      %385 = vector.shape_cast %53 : vector<1x256xf32> to vector<1x256xf32>
      %386 = vector.broadcast %385 : vector<1x256xf32> to vector<128x256xf32>
      %387 = vector.broadcast %cst_107 : f32 to vector<128x256xf32>
      %388 = arith.select %384, %386, %387 : vector<128x256xi1>, vector<128x256xf32>
      %389 = vector.broadcast %379 : i32 to vector<1x256xi32>
      %390 = arith.subi %111, %389 : vector<1x256xi32>
      %391 = vector.broadcast %360 : vector<128x1xi32> to vector<128x256xi32>
      %392 = vector.broadcast %390 : vector<1x256xi32> to vector<128x256xi32>
      %393 = arith.cmpi eq, %391, %392 : vector<128x256xi32>
      %394 = vector.shape_cast %96 : vector<1x256xf32> to vector<1x256xf32>
      %395 = vector.broadcast %394 : vector<1x256xf32> to vector<128x256xf32>
      %396 = vector.broadcast %cst_107 : f32 to vector<128x256xf32>
      %397 = arith.select %393, %395, %396 : vector<128x256xi1>, vector<128x256xf32>
      %398 = arith.addf %388, %397 : vector<128x256xf32>
      %399 = vector.broadcast %379 : i32 to vector<1x256xi32>
      %400 = arith.subi %154, %399 : vector<1x256xi32>
      %401 = vector.broadcast %360 : vector<128x1xi32> to vector<128x256xi32>
      %402 = vector.broadcast %400 : vector<1x256xi32> to vector<128x256xi32>
      %403 = arith.cmpi eq, %401, %402 : vector<128x256xi32>
      %404 = vector.shape_cast %139 : vector<1x256xf32> to vector<1x256xf32>
      %405 = vector.broadcast %404 : vector<1x256xf32> to vector<128x256xf32>
      %406 = vector.broadcast %cst_107 : f32 to vector<128x256xf32>
      %407 = arith.select %403, %405, %406 : vector<128x256xi1>, vector<128x256xf32>
      %408 = arith.addf %398, %407 : vector<128x256xf32>
      %409 = vector.broadcast %379 : i32 to vector<1x256xi32>
      %410 = arith.subi %195, %409 : vector<1x256xi32>
      %411 = vector.broadcast %360 : vector<128x1xi32> to vector<128x256xi32>
      %412 = vector.broadcast %410 : vector<1x256xi32> to vector<128x256xi32>
      %413 = arith.cmpi eq, %411, %412 : vector<128x256xi32>
      %414 = vector.shape_cast %180 : vector<1x256xf32> to vector<1x256xf32>
      %415 = vector.broadcast %414 : vector<1x256xf32> to vector<128x256xf32>
      %416 = vector.broadcast %cst_107 : f32 to vector<128x256xf32>
      %417 = arith.select %413, %415, %416 : vector<128x256xi1>, vector<128x256xf32>
      %418 = arith.addf %408, %417 : vector<128x256xf32>
      %419 = vector.broadcast %379 : i32 to vector<1x256xi32>
      %420 = arith.subi %238, %419 : vector<1x256xi32>
      %421 = vector.broadcast %360 : vector<128x1xi32> to vector<128x256xi32>
      %422 = vector.broadcast %420 : vector<1x256xi32> to vector<128x256xi32>
      %423 = arith.cmpi eq, %421, %422 : vector<128x256xi32>
      %424 = vector.shape_cast %223 : vector<1x256xf32> to vector<1x256xf32>
      %425 = vector.broadcast %424 : vector<1x256xf32> to vector<128x256xf32>
      %426 = vector.broadcast %cst_107 : f32 to vector<128x256xf32>
      %427 = arith.select %423, %425, %426 : vector<128x256xi1>, vector<128x256xf32>
      %428 = arith.addf %418, %427 : vector<128x256xf32>
      %429 = vector.broadcast %379 : i32 to vector<1x256xi32>
      %430 = arith.subi %279, %429 : vector<1x256xi32>
      %431 = vector.broadcast %360 : vector<128x1xi32> to vector<128x256xi32>
      %432 = vector.broadcast %430 : vector<1x256xi32> to vector<128x256xi32>
      %433 = arith.cmpi eq, %431, %432 : vector<128x256xi32>
      %434 = vector.shape_cast %264 : vector<1x256xf32> to vector<1x256xf32>
      %435 = vector.broadcast %434 : vector<1x256xf32> to vector<128x256xf32>
      %436 = vector.broadcast %cst_107 : f32 to vector<128x256xf32>
      %437 = arith.select %433, %435, %436 : vector<128x256xi1>, vector<128x256xf32>
      %438 = arith.addf %428, %437 : vector<128x256xf32>
      %439 = vector.broadcast %379 : i32 to vector<1x256xi32>
      %440 = arith.subi %320, %439 : vector<1x256xi32>
      %441 = vector.broadcast %360 : vector<128x1xi32> to vector<128x256xi32>
      %442 = vector.broadcast %440 : vector<1x256xi32> to vector<128x256xi32>
      %443 = arith.cmpi eq, %441, %442 : vector<128x256xi32>
      %444 = vector.shape_cast %305 : vector<1x256xf32> to vector<1x256xf32>
      %445 = vector.broadcast %444 : vector<1x256xf32> to vector<128x256xf32>
      %446 = vector.broadcast %cst_107 : f32 to vector<128x256xf32>
      %447 = arith.select %443, %445, %446 : vector<128x256xi1>, vector<128x256xf32>
      %448 = arith.addf %438, %447 : vector<128x256xf32>
      %449 = vector.broadcast %379 : i32 to vector<1x256xi32>
      %450 = arith.subi %359, %449 : vector<1x256xi32>
      %451 = vector.broadcast %360 : vector<128x1xi32> to vector<128x256xi32>
      %452 = vector.broadcast %450 : vector<1x256xi32> to vector<128x256xi32>
      %453 = arith.cmpi eq, %451, %452 : vector<128x256xi32>
      %454 = vector.shape_cast %344 : vector<1x256xf32> to vector<1x256xf32>
      %455 = vector.broadcast %454 : vector<1x256xf32> to vector<128x256xf32>
      %456 = vector.broadcast %cst_107 : f32 to vector<128x256xf32>
      %457 = arith.select %453, %455, %456 : vector<128x256xi1>, vector<128x256xf32>
      %458 = arith.addf %448, %457 : vector<128x256xf32>
      %459 = arith.truncf %458 : vector<128x256xf32> to vector<128x256xbf16>
      %c0_116 = arith.constant 0 : index
      %c0_117 = arith.constant 0 : index
      %460 = arith.index_cast %379 : i32 to index
      %461 = vector.load %arg7[%c0_116, %c0_117, %460] : memref<1x2x4096xbf16, #tpu.memory_space<vmem>>, vector<1x2x128xbf16>
      %462 = vector.shape_cast %461 : vector<1x2x128xbf16> to vector<2x128xbf16>
      %c0_118 = arith.constant 0 : index
      %c0_119 = arith.constant 0 : index
      %463 = vector.load %arg9[%c0_118, %c0_119] : memref<2x256xf32, #tpu.memory_space<vmem>>, vector<2x256xf32>
      %cst_120 = arith.constant dense<0.000000e+00> : vector<2x256xf32>
      %464 = tpu.matmul %462, %459, %cst_120 {dimension_numbers = #tpu.dot_dimension_numbers<[1], [0], [0], [1], [0, 0, 1, 1], [], []>} : vector<2x128xbf16>, vector<128x256xbf16>, vector<2x256xf32> -> vector<2x256xf32>
      %465 = arith.addf %463, %464 : vector<2x256xf32>
      %c0_121 = arith.constant 0 : index
      %c0_122 = arith.constant 0 : index
      %466 = vector.load %arg9[%c0_121, %c0_122] : memref<2x256xf32, #tpu.memory_space<vmem>>, vector<2x256xf32>
      tpu.vector_store %arg9[%c0_121, %c0_122], %465 {strides = array<i32>} : memref<2x256xf32, #tpu.memory_space<vmem>>, vector<2x256xf32>,
    }
    %c0_110 = arith.constant 0 : index
    %c0_111 = arith.constant 0 : index
    %371 = vector.load %arg9[%c0_110, %c0_111] : memref<2x256xf32, #tpu.memory_space<vmem>>, vector<2x256xf32>
    %372 = arith.truncf %371 : vector<2x256xf32> to vector<2x256xbf16>
    %c0_112 = arith.constant 0 : index
    %c0_113 = arith.constant 0 : index
    %c0_114 = arith.constant 0 : index
    %373 = vector.load %arg8[%c0_112, %c0_113, %c0_114] : memref<1x2x256xbf16, #tpu.memory_space<vmem>>, vector<1x2x256xbf16>
    %374 = vector.shape_cast %373 : vector<1x2x256xbf16> to vector<2x256xbf16>
    %375 = vector.shape_cast %372 : vector<2x256xbf16> to vector<1x2x256xbf16>
    tpu.vector_store %arg8[%c0_112, %c0_113, %c0_114], %375 {strides = array<i32>} : memref<1x2x256xbf16, #tpu.memory_space<vmem>>, vector<1x2x256xbf16>,
    return
  }
  func.func @transform_0(%arg0: i32, %arg1: i32) -> i32 {
    %c0_i32 = arith.constant 0 : i32
    %c0_i32_0 = arith.constant 0 : i32
    return %c0_i32 : i32
  }
  func.func @transform_1(%arg0: i32, %arg1: i32) -> i32 {
    %c0_i32 = arith.constant 0 : i32
    %c0_i32_0 = arith.constant 0 : i32
    return %c0_i32 : i32
  }
  func.func @transform_2(%arg0: i32, %arg1: i32) -> i32 {
    %c0_i32 = arith.constant 0 : i32
    %c0_i32_0 = arith.constant 0 : i32
    return %c0_i32 : i32
  }
  func.func @transform_3(%arg0: i32, %arg1: i32) -> i32 {
    %c0_i32 = arith.constant 0 : i32
    %c0_i32_0 = arith.constant 0 : i32
    return %c0_i32 : i32
  }
  func.func @transform_4(%arg0: i32, %arg1: i32) -> (i32, i32) {
    %c0_i32 = arith.constant 0 : i32
    %c0_i32_0 = arith.constant 0 : i32
    return %c0_i32, %arg1 : i32, i32
  }
  func.func @transform_5(%arg0: i32, %arg1: i32) -> (i32, i32, i32) {
    %c0_i32 = arith.constant 0 : i32
    %c0_i32_0 = arith.constant 0 : i32
    %c0_i32_1 = arith.constant 0 : i32
    return %arg0, %c0_i32, %c0_i32_0 : i32, i32, i32
  }
  func.func @transform_6(%arg0: i32, %arg1: i32) -> (i32, i32, i32) {
    %c0_i32 = arith.constant 0 : i32
    %c0_i32_0 = arith.constant 0 : i32
    return %arg0, %c0_i32, %arg1 : i32, i32, i32
  }
}

</mosaic_0001>

<llo_original>
// kernel: tpu_custom_call.1
$region0: #{tpu_custom_call.1}
  #allocation0 [shape = 'u32[]', space=smem, size = 0x4, offset = 0x4, fixed_abs, tag = 'smem constant byte address 0x4 - core index']
  #allocation1 [shape = 'u32[72,128]{1,0:T(1,128)}', space=vmem, size = 0x9000, scoped, tag = 'internal scratch']
  #allocation2 [shape = 'f32[2,256]{1,0:T(2,128)}', space=vmem, size = 0x800, scoped, tag = 'scratch operand']
  %s0 = inlined_call_operand.hbm [shape: f32[8], index: 0, kind: input, shape index: {}]
  %s1 = inlined_call_operand.hbm [shape: s32[8], index: 1, kind: input, shape index: {}]
  %s2 = inlined_call_operand.vmem [shape: s32[8], index: 2, kind: input, shape index: {}]
  %s3 = inlined_call_operand.vmem [shape: s32[8], index: 3, kind: input, shape index: {}]
  %s4 = inlined_call_operand.hbm [shape: f32[3,512], index: 4, kind: input, shape index: {}]
  %s5 = inlined_call_operand.hbm [shape: bf16[8,2,4096], index: 5, kind: input, shape index: {}]
  %s6 = inlined_call_operand.hbm [shape: bf16[8,2,512], index: 6, kind: output, shape index: {}]
  %s7 = sld [smem:[#allocation0]]
  $region88: #{tpu_custom_call.1} parent=0
    _
  %s9 = ssub.s32 1, %s7
  %s10 = scalar_select 0, %s9, %s7
  $region1: #{tpu_custom_call.1} parent=0
    #allocation3 [shape = 'u8[512]{0}', space=smem, size = 0x200, scoped, tag = 'input window, operand 0, single buffered']
    #allocation4 [shape = 's32[2]{0}', space=sflag, size = 0x8, scoped, tag = 'scoped memory for tpu_custom_call.1']
    #allocation5 [shape = 's32[2]{0}', space=sflag, size = 0x8, scoped, tag = 'scoped memory for tpu_custom_call.1']
    #allocation6 [shape = 's32[2]{0}', space=sflag, size = 0x8, scoped, tag = 'scoped memory for tpu_custom_call.1']
    #allocation7 [shape = 's32[2]{0}', space=sflag, size = 0x8, scoped, tag = 'scoped memory for tpu_custom_call.1']
    #allocation8 [shape = 'u8[512]{0}', space=smem, size = 0x200, scoped, tag = 'input window, operand 1, single buffered']
    #allocation9 [shape = 's32[1]{0}', space=sflag, size = 0x4, scoped, tag = 'scoped memory for tpu_custom_call.1']
    #allocation10 [shape = 'u8[512]{0}', space=smem, size = 0x200, scoped, tag = 'input window, operand 2, single buffered']
    #allocation11 [shape = 'u8[512]{0}', space=smem, size = 0x200, scoped, tag = 'input window, operand 3, single buffered']
    #allocation12 [shape = 's32[1]{0}', space=sflag, size = 0x4, scoped, tag = 'scoped memory for tpu_custom_call.1']
    #allocation13 [shape = 'u8[8192]{0}', space=vmem, size = 0x2000, scoped, tag = 'input window, operand 4']
    #allocation14 [shape = 'u8[32768]{0}', space=vmem, size = 0x8000, scoped, tag = 'input window, operand 5']
    #allocation15 [shape = 's32[2]{0}', space=sflag, size = 0x8, scoped, tag = 'scoped memory for tpu_custom_call.1']
    #allocation16 [shape = 'u8[2048]{0}', space=vmem, size = 0x800, scoped, tag = 'output window, operand 0']
    %11 = vsyncpa [#allocation6], 0
    %12 = vsyncpa [#allocation9], 0
    %13 = vsyncpa [#allocation7], 0
    %14 = vsyncpa [#allocation12], 0
    %15 = vsyncpa [#allocation4], 0
    %s16 = scalar_lea.sflag [#allocation4], 1
    %17 = vsyncpa %s16, 0
    %18 = vsyncpa [#allocation15], 0
    %s19 = scalar_lea.sflag [#allocation15], 1
    %20 = vsyncpa %s19, 0
    %21 = vsyncpa [#allocation5], 0
    %s22 = scalar_lea.sflag [#allocation5], 1
    %23 = vsyncpa %s22, 0
    loop: start=0, step=1, limit=18
    $region2: #{tpu_custom_call.1} parent=1 // loop_pre_header
      _
    $region3: #{tpu_custom_call.1} parent=1 // loop_header
      %s25 = sphi 0, %s29
      %p26 = scmp.ge.s32.totalorder %s25, 18
      %s32 = sphi 0, %s44
      %s33 = sphi 0, %s40
      %s34 = sphi 0, %s32
      %s35 = sphi 0, %s33
      %s36 = sphi 0, %s34
      %s37 = sphi 0, %s35
      %s45 = sphi 0, %s45
      %s47 = sphi 0, %s45
      %s48 = sphi 0, %s47
      %s62 = sphi 0, %s48
      %s66 = sphi 0, %s66
      %s68 = sphi 0, %s66
      %s69 = sphi 0, %s68
      %s83 = sphi 0, %s69
      %s87 = sphi 0, %s87
      %s89 = sphi 0, %s87
      %s90 = sphi 0, %s89
      %s104 = sphi 0, %s90
      %s108 = sphi 0, %s108
      %s110 = sphi 0, %s108
      %s111 = sphi 0, %s110
      %s125 = sphi 0, %s111
      %s131 = sphi 0, %s133
      %s134 = sphi 0, %s131
      %s135 = sphi 0, %s134
      %s151 = sphi 0, %s135
      %s157 = sphi 0, %s159
      %s160 = sphi 0, %s157
      %s161 = sphi 0, %s160
      %s177 = sphi 0, %s161
      %s185 = sphi 0, %s187
      %s188 = sphi 0, %s185
      %s189 = sphi 0, %s188
      %s205 = sphi 0, %s189
    $region4: #{tpu_custom_call.1} parent=1 // loop_header_branch
      %28 = sbr.rel (%p26) target = $region8
    $region5: #{tpu_custom_call.1} parent=1 // loop_body
      %s30 = ssub.s32 %s25, 1
      %s31 = ssub.s32 %s25, 2
      %s38 = sadd.s32 1, %s33
      %p39 = scmp.ge.s32.totalorder %s38, 2
      %s40 = scalar_select %p39, 0, %s38
      %s41 = sadd.s32 1, %s32
      %s42 = scalar_select %p39, %s41, %s32
      %p43 = scmp.ge.s32.totalorder %s42, 8
      %s44 = scalar_select %p43, 0, %s42
      %s46 = sadd.s32 %s45, 1
      %p49 = scmp.eq.s32.totalorder %s25, 15
      %p50 = scmp.ne.s32.totalorder %s45, %s47
      %p51 = scmp.eq.s32.totalorder %s25, 0
      %p52 = por %p50, %p51
      %p53 = scmp.ne.s32.totalorder %s45, %s47
      %p54 = scmp.eq.s32.totalorder %s30, 15
      %p55 = por %p53, %p54
      %p56 = scmp.ne.s32.totalorder %s47, %s48
      %p57 = scmp.eq.s32.totalorder %s30, 0
      %p58 = por %p56, %p57
      %p59 = scmp.ne.s32.totalorder %s47, %s48
      %p60 = scmp.eq.s32.totalorder %s31, 15
      %p61 = por %p59, %p60
      %p63 = scmp.ne.s32.totalorder %s48, %s62
      %p64 = scmp.eq.s32.totalorder %s31, 0
      %p65 = por %p63, %p64
      %s67 = sadd.s32 %s66, 1
      %p70 = scmp.eq.s32.totalorder %s25, 15
      %p71 = scmp.ne.s32.totalorder %s66, %s68
      %p72 = scmp.eq.s32.totalorder %s25, 0
      %p73 = por %p71, %p72
      %p74 = scmp.ne.s32.totalorder %s66, %s68
      %p75 = scmp.eq.s32.totalorder %s30, 15
      %p76 = por %p74, %p75
      %p77 = scmp.ne.s32.totalorder %s68, %s69
      %p78 = scmp.eq.s32.totalorder %s30, 0
      %p79 = por %p77, %p78
      %p80 = scmp.ne.s32.totalorder %s68, %s69
      %p81 = scmp.eq.s32.totalorder %s31, 15
      %p82 = por %p80, %p81
      %p84 = scmp.ne.s32.totalorder %s69, %s83
      %p85 = scmp.eq.s32.totalorder %s31, 0
      %p86 = por %p84, %p85
      %s88 = sadd.s32 %s87, 1
      %p91 = scmp.eq.s32.totalorder %s25, 15
      %p92 = scmp.ne.s32.totalorder %s87, %s89
      %p93 = scmp.eq.s32.totalorder %s25, 0
      %p94 = por %p92, %p93
      %p95 = scmp.ne.s32.totalorder %s87, %s89
      %p96 = scmp.eq.s32.totalorder %s30, 15
      %p97 = por %p95, %p96
      %p98 = scmp.ne.s32.totalorder %s89, %s90
      %p99 = scmp.eq.s32.totalorder %s30, 0
      %p100 = por %p98, %p99
      %p101 = scmp.ne.s32.totalorder %s89, %s90
      %p102 = scmp.eq.s32.totalorder %s31, 15
      %p103 = por %p101, %p102
      %p105 = scmp.ne.s32.totalorder %s90, %s104
      %p106 = scmp.eq.s32.totalorder %s31, 0
      %p107 = por %p105, %p106
      %s109 = sadd.s32 %s108, 1
      %p112 = scmp.eq.s32.totalorder %s25, 15
      %p113 = scmp.ne.s32.totalorder %s108, %s110
      %p114 = scmp.eq.s32.totalorder %s25, 0
      %p115 = por %p113, %p114
      %p116 = scmp.ne.s32.totalorder %s108, %s110
      %p117 = scmp.eq.s32.totalorder %s30, 15
      %p118 = por %p116, %p117
      %p119 = scmp.ne.s32.totalorder %s110, %s111
      %p120 = scmp.eq.s32.totalorder %s30, 0
      %p121 = por %p119, %p120
      %p122 = scmp.ne.s32.totalorder %s110, %s111
      %p123 = scmp.eq.s32.totalorder %s31, 15
      %p124 = por %p122, %p123
      %p126 = scmp.ne.s32.totalorder %s111, %s125
      %p127 = scmp.eq.s32.totalorder %s31, 0
      %p128 = por %p126, %p127
      %s129 = ssub.s32 %s33, %s40
      %p130 = scmp.eq.s32.totalorder %s129, 0
      %s132 = sadd.s32 %s131, 1
      %s133 = scalar_select %p130, %s131, %s132
      %p136 = pneg %p130
      %p137 = scmp.eq.s32.totalorder %s25, 15
      %p138 = por %p136, %p137
      %p139 = scmp.ne.s32.totalorder %s131, %s134
      %p140 = scmp.eq.s32.totalorder %s25, 0
      %p141 = por %p139, %p140
      %p142 = scmp.ne.s32.totalorder %s131, %s134
      %p143 = scmp.eq.s32.totalorder %s30, 15
      %p144 = por %p142, %p143
      %p145 = scmp.ne.s32.totalorder %s134, %s135
      %p146 = scmp.eq.s32.totalorder %s30, 0
      %p147 = por %p145, %p146
      %p148 = scmp.ne.s32.totalorder %s134, %s135
      %p149 = scmp.eq.s32.totalorder %s31, 15
      %p150 = por %p148, %p149
      %p152 = scmp.ne.s32.totalorder %s135, %s151
      %p153 = scmp.eq.s32.totalorder %s31, 0
      %p154 = por %p152, %p153
      %s155 = ssub.s32 %s32, %s44
      %p156 = scmp.eq.s32.totalorder %s155, 0
      %s158 = sadd.s32 %s157, 1
      %s159 = scalar_select %p156, %s157, %s158
      %p162 = pneg %p156
      %p163 = scmp.eq.s32.totalorder %s25, 15
      %p164 = por %p162, %p163
      %p165 = scmp.ne.s32.totalorder %s157, %s160
      %p166 = scmp.eq.s32.totalorder %s25, 0
      %p167 = por %p165, %p166
      %p168 = scmp.ne.s32.totalorder %s157, %s160
      %p169 = scmp.eq.s32.totalorder %s30, 15
      %p170 = por %p168, %p169
      %p171 = scmp.ne.s32.totalorder %s160, %s161
      %p172 = scmp.eq.s32.totalorder %s30, 0
      %p173 = por %p171, %p172
      %p174 = scmp.ne.s32.totalorder %s160, %s161
      %p175 = scmp.eq.s32.totalorder %s31, 15
      %p176 = por %p174, %p175
      %p178 = scmp.ne.s32.totalorder %s161, %s177
      %p179 = scmp.eq.s32.totalorder %s31, 0
      %p180 = por %p178, %p179
      %s181 = ssub.s32 %s32, %s44
      %s182 = ssub.s32 %s33, %s40
      %s183 = sor.u32 %s181, %s182
      %p184 = scmp.eq.s32.totalorder %s183, 0
      %s186 = sadd.s32 %s185, 1
      %s187 = scalar_select %p184, %s185, %s186
      %p190 = pneg %p184
      %p191 = scmp.eq.s32.totalorder %s25, 15
      %p192 = por %p190, %p191
      %p193 = scmp.ne.s32.totalorder %s185, %s188
      %p194 = scmp.eq.s32.totalorder %s25, 0
      %p195 = por %p193, %p194
      %p196 = scmp.ne.s32.totalorder %s185, %s188
      %p197 = scmp.eq.s32.totalorder %s30, 15
      %p198 = por %p196, %p197
      %p199 = scmp.ne.s32.totalorder %s188, %s189
      %p200 = scmp.eq.s32.totalorder %s30, 0
      %p201 = por %p199, %p200
      %p202 = scmp.ne.s32.totalorder %s188, %s189
      %p203 = scmp.eq.s32.totalorder %s31, 15
      %p204 = por %p202, %p203
      %p206 = scmp.ne.s32.totalorder %s189, %s205
      %p207 = scmp.eq.s32.totalorder %s31, 0
      %p208 = por %p206, %p207
      %p209 = scmp.le.s32.totalorder 1, %s25
      %p210 = scmp.lt.s32.totalorder %s25, 17
      %p211 = pnand %p209, %p210
      %p212 = pneg %p211
      // Predicated region
      $region9: #{tpu_custom_call.1} parent=5 // pred_check
        _
      $region10: #{tpu_custom_call.1} parent=5 // pred_check_branch
        %214 = sbr.rel (%p211) target = $region12
      $region11: #{tpu_custom_call.1} parent=5 // pred_region
        %s215 = ssub.s32 %s25, 1
        // Predicated region
        $region13: #{tpu_custom_call.1} parent=11 // pred_check
          %p216 = pneg %p58
        $region14: #{tpu_custom_call.1} parent=11 // pred_check_branch
          %218 = sbr.rel (%p216) target = $region16
        $region15: #{tpu_custom_call.1} parent=11 // pred_region
          %220 = vsyncadd [#allocation6], 0
          %s222 = sshll.u32 %s0, 4
          %s223 = int_to_ptr.hbm [resolvable:$true] %s222
          %225 = dma.hbm_to_smem %s223, 16, [#allocation3], [#allocation6]
        $region16: #{tpu_custom_call.1} parent=11 // pred_fallthru
          _
        // Predicated region
        $region17: #{tpu_custom_call.1} parent=11 // pred_check
          %p226 = pneg %p79
        $region18: #{tpu_custom_call.1} parent=11 // pred_check_branch
          %228 = sbr.rel (%p226) target = $region20
        $region19: #{tpu_custom_call.1} parent=11 // pred_region
          %230 = vsyncadd [#allocation9], 0
          %s232 = sshll.u32 %s1, 4
          %s233 = int_to_ptr.hbm [resolvable:$true] %s232
          %235 = dma.hbm_to_smem %s233, 16, [#allocation8], [#allocation9]
        $region20: #{tpu_custom_call.1} parent=11 // pred_fallthru
          _
        // Predicated region
        $region21: #{tpu_custom_call.1} parent=11 // pred_check
          %p236 = pneg %p100
        $region22: #{tpu_custom_call.1} parent=11 // pred_check_branch
          %238 = sbr.rel (%p236) target = $region24
        $region23: #{tpu_custom_call.1} parent=11 // pred_region
          %240 = vsyncadd [#allocation7], 0
          %s242 = sshll.u32 %s2, 4
          %s243 = int_to_ptr.vmem [resolvable:$true] %s242
          %245 = dma.vmem_to_smem %s243, 16, [#allocation10], [#allocation7]
        $region24: #{tpu_custom_call.1} parent=11 // pred_fallthru
          _
        // Predicated region
        $region25: #{tpu_custom_call.1} parent=11 // pred_check
          %p246 = pneg %p121
        $region26: #{tpu_custom_call.1} parent=11 // pred_check_branch
          %248 = sbr.rel (%p246) target = $region28
        $region27: #{tpu_custom_call.1} parent=11 // pred_region
          %250 = vsyncadd [#allocation12], 0
          %s252 = sshll.u32 %s3, 4
          %s253 = int_to_ptr.vmem [resolvable:$true] %s252
          %255 = dma.vmem_to_smem %s253, 16, [#allocation11], [#allocation12]
        $region28: #{tpu_custom_call.1} parent=11 // pred_fallthru
          _
      $region12: #{tpu_custom_call.1} parent=5 // pred_fallthru
        _
      %p256 = scmp.lt.s32.totalorder %s25, 16
      // Predicated region
      $region29: #{tpu_custom_call.1} parent=5 // pred_check
        %p257 = pneg %p256
      $region30: #{tpu_custom_call.1} parent=5 // pred_check_branch
        %259 = sbr.rel (%p257) target = $region32
      $region31: #{tpu_custom_call.1} parent=5 // pred_region
        // Predicated region
        $region33: #{tpu_custom_call.1} parent=31 // pred_check
          %p260 = pneg %p141
        $region34: #{tpu_custom_call.1} parent=31 // pred_check_branch
          %262 = sbr.rel (%p260) target = $region36
        $region35: #{tpu_custom_call.1} parent=31 // pred_region
          %s263 = sand.u32 %s131, 1
          %s264 = scalar_lea.sflag [#allocation4], %s263
          %s265 = sand.u32 %s131, 1
          %s266 = smul.addr %s265, 8
          %s267 = scalar_lea.vmem [#allocation13], %s266
          %s268 = smul.u32 2, %s33
          %270 = vsyncadd %s264, 0
          %s271 = smul.addr %s268, 4
          %s272 = scalar_lea.hbm %s4, %s271
          %s274 = sshll.u32 %s272, 4
          %s275 = int_to_ptr.hbm [resolvable:$true] %s274
          %s276 = sshll.u32 %s267, 4
          %s277 = int_to_ptr.vmem [resolvable:$true] %s276
          %279 = dma.hbm_to_vmem [thread:$0]  %s275, 128, %s277, %s264
        $region36: #{tpu_custom_call.1} parent=31 // pred_fallthru
          _
        // Predicated region
        $region37: #{tpu_custom_call.1} parent=31 // pred_check
          %p280 = pneg %p167
        $region38: #{tpu_custom_call.1} parent=31 // pred_check_branch
          %282 = sbr.rel (%p280) target = $region40
        $region39: #{tpu_custom_call.1} parent=31 // pred_region
          %s283 = sand.u32 %s157, 1
          %s284 = scalar_lea.sflag [#allocation15], %s283
          %s285 = sand.u32 %s157, 1
          %s286 = smul.addr %s285, 32
          %s287 = scalar_lea.vmem [#allocation14], %s286
          %289 = vsyncadd %s284, 0
          %s290 = smul.addr %s32, 32
          %s291 = scalar_lea.hbm %s5, %s290
          %s293 = sshll.u32 %s291, 4
          %s294 = int_to_ptr.hbm [resolvable:$true] %s293
          %s295 = sshll.u32 %s287, 4
          %s296 = int_to_ptr.vmem [resolvable:$true] %s295
          %298 = dma.hbm_to_vmem [thread:$0]  %s294, 512, %s296, %s284
        $region40: #{tpu_custom_call.1} parent=31 // pred_fallthru
          _
      $region32: #{tpu_custom_call.1} parent=5 // pred_fallthru
        _
      %p299 = scmp.le.s32.totalorder 1, %s25
      %p300 = scmp.lt.s32.totalorder %s25, 17
      %p301 = pnand %p299, %p300
      %p302 = pneg %p301
      // Predicated region
      $region41: #{tpu_custom_call.1} parent=5 // pred_check
        _
      $region42: #{tpu_custom_call.1} parent=5 // pred_check_branch
        %304 = sbr.rel (%p301) target = $region44
      $region43: #{tpu_custom_call.1} parent=5 // pred_region
        %s305 = ssub.s32 %s25, 1
        // Predicated region
        $region45: #{tpu_custom_call.1} parent=43 // pred_check
          %p306 = pneg %p58
        $region46: #{tpu_custom_call.1} parent=43 // pred_check_branch
          %308 = sbr.rel (%p306) target = $region48
        $region47: #{tpu_custom_call.1} parent=43 // pred_region
          %310 = dma.done [#allocation6], 16
        $region48: #{tpu_custom_call.1} parent=43 // pred_fallthru
          _
        // Predicated region
        $region49: #{tpu_custom_call.1} parent=43 // pred_check
          %p311 = pneg %p79
        $region50: #{tpu_custom_call.1} parent=43 // pred_check_branch
          %313 = sbr.rel (%p311) target = $region52
        $region51: #{tpu_custom_call.1} parent=43 // pred_region
          %315 = dma.done [#allocation9], 16
        $region52: #{tpu_custom_call.1} parent=43 // pred_fallthru
          _
        // Predicated region
        $region53: #{tpu_custom_call.1} parent=43 // pred_check
          %p316 = pneg %p100
        $region54: #{tpu_custom_call.1} parent=43 // pred_check_branch
          %318 = sbr.rel (%p316) target = $region56
        $region55: #{tpu_custom_call.1} parent=43 // pred_region
          %320 = dma.done [#allocation7], 16
        $region56: #{tpu_custom_call.1} parent=43 // pred_fallthru
          _
        // Predicated region
        $region57: #{tpu_custom_call.1} parent=43 // pred_check
          %p321 = pneg %p121
        $region58: #{tpu_custom_call.1} parent=43 // pred_check_branch
          %323 = sbr.rel (%p321) target = $region60
        $region59: #{tpu_custom_call.1} parent=43 // pred_region
          %325 = dma.done [#allocation12], 16
        $region60: #{tpu_custom_call.1} parent=43 // pred_fallthru
          _
        %s326 = sand.u32 %s134, 1
        %s327 = scalar_lea.sflag [#allocation4], %s326
        %s328 = sand.u32 %s134, 1
        %s329 = smul.addr %s328, 8
        %s330 = scalar_lea.vmem [#allocation13], %s329
        // Predicated region
        $region61: #{tpu_custom_call.1} parent=43 // pred_check
          %p331 = pneg %p147
        $region62: #{tpu_custom_call.1} parent=43 // pred_check_branch
          %333 = sbr.rel (%p331) target = $region64
        $region63: #{tpu_custom_call.1} parent=43 // pred_region
          %335 = dma.done %s327, 128
        $region64: #{tpu_custom_call.1} parent=43 // pred_fallthru
          _
        %s336 = sand.u32 %s160, 1
        %s337 = scalar_lea.sflag [#allocation15], %s336
        %s338 = sand.u32 %s160, 1
        %s339 = smul.addr %s338, 32
        %s340 = scalar_lea.vmem [#allocation14], %s339
        // Predicated region
        $region65: #{tpu_custom_call.1} parent=43 // pred_check
          %p341 = pneg %p173
        $region66: #{tpu_custom_call.1} parent=43 // pred_check_branch
          %343 = sbr.rel (%p341) target = $region68
        $region67: #{tpu_custom_call.1} parent=43 // pred_region
          %345 = dma.done %s337, 512
        $region68: #{tpu_custom_call.1} parent=43 // pred_fallthru
          _
        %346 = sfence
        %p347 = pneg %p58
        %p348 = pneg %p55
        %p349 = pneg %p79
        %p350 = pneg %p76
        %p351 = pneg %p100
        %p352 = pneg %p97
        %p353 = pneg %p121
        %p354 = pneg %p118
        %s355 = sand.u32 %s134, 1
        %s356 = scalar_lea.sflag [#allocation4], %s355
        %s357 = sand.u32 %s134, 1
        %s358 = smul.addr %s357, 8
        %s359 = scalar_lea.vmem [#allocation13], %s358
        %p360 = pneg %p147
        %p361 = pneg %p144
        %s362 = sand.u32 %s160, 1
        %s363 = scalar_lea.sflag [#allocation15], %s362
        %s364 = sand.u32 %s160, 1
        %s365 = smul.addr %s364, 32
        %s366 = scalar_lea.vmem [#allocation14], %s365
        %p367 = pneg %p173
        %p368 = pneg %p170
        %p369 = pneg %p201
        %p370 = pneg %p198
        %s371 = sand.u32 %s188, 1
        %s372 = scalar_lea.sflag [#allocation5], %s371
        %s373 = sand.u32 %s188, 1
        %s374 = smul.addr %s373, 2
        %s375 = scalar_lea.vmem [#allocation16], %s374
        %s376 = smul.u32 2, %s35
        %s377 = smul.u32 2, %s35
        %s378 = sld [smem:[#allocation3 + %s34]]
        %s379 = sld [smem:[#allocation8 + %s34]]
        %s380 = sld [smem:[#allocation10 + %s34]]
        %s381 = sld [smem:[#allocation11 + %s34]]
        %v382 = vld [vmem:[%s330] sm:$0x77]
        %v383 = vstv %s378
        %v384 = vmul.f32 %v382, %v383
        %v385 = vadd.f32 %v384, 0.5
        %v386 = vfloor.f32 %v385
        %v387 = vsub.f32 %v385, %v386
        %v388 = vcvt.f32.s32.to.zero.pseudo %v386
        %s389 = smul.u32 %s379, %s379
        %s390 = ssub.s32 %s380, 1
        %v391 = vsub.f32 1.0, %v387
        %v393 = vrot.slane %v391, 5
        %v394 = vrot.slane %v393, 4
        %v396 = vmul.f32 %v391, %v394
        %v397 = vstv %s379
        %v398 = vmul.u32 %v388, %v397
        %v399 = vrot.slane %v398, 5
        %v400 = vrot.slane %v399, 4
        %v401 = vadd.s32 %v388, %v400
        %v402 = vmul.u32 %v388, 2654435761
        %v403 = vrot.slane %v402, 5
        %v404 = vrot.slane %v403, 4
        %v405 = vxor.u32 %v388, %v404
        %v406 = vrot.slane %v391, 6
        %v407 = vrot.slane %v406, 4
        %v409 = vmul.f32 %v396, %v407
        %v410 = vstv %s389
        %v411 = vmul.u32 %v388, %v410
        %v412 = vrot.slane %v411, 6
        %v413 = vrot.slane %v412, 4
        %v414 = vadd.s32 %v401, %v413
        %v415 = vmul.u32 %v388, 805459861
        %v416 = vrot.slane %v415, 6
        %v417 = vrot.slane %v416, 4
        %v418 = vxor.u32 %v405, %v417
        %v419 = vstv %s380
        %vm420 = vcmp.ge.s32.totalorder %v414, %v419
        %v421 = vsub.s32 %v414, %v419
        %v422 = vsel %vm420, %v421, %v414
        %v423 = vstv %s390
        %v424 = vand.u32 %v418, %v423
        %p425 = scmp.ne.s32.totalorder %s381, 0
        %s426 = scalar_select %p425, 1, 0
        %v427 = vstv %s426
        %vm428 = vcmp.eq.s32.totalorder %v427, 1
        %v429 = vsel %vm428, %v424, %v422
        %v430 = vadd.s32 %v388, 1
        %v431 = vmul.f32 %v387, %v394
        %v432 = vadd.s32 %v430, %v400
        %v433 = vxor.u32 %v430, %v404
        %v434 = vmul.f32 %v431, %v407
        %v435 = vadd.s32 %v432, %v413
        %v436 = vxor.u32 %v433, %v417
        %vm437 = vcmp.ge.s32.totalorder %v435, %v419
        %v438 = vsub.s32 %v435, %v419
        %v439 = vsel %vm437, %v438, %v435
        %v440 = vand.u32 %v436, %v423
        %v441 = vsel %vm428, %v440, %v439
        %v443 = vrot.slane %v387, 5
        %v444 = vrot.slane %v443, 4
        %v446 = vmul.f32 %v391, %v444
        %v447 = vmul.u32 %v430, %v397
        %v448 = vrot.slane %v447, 5
        %v449 = vrot.slane %v448, 4
        %v450 = vadd.s32 %v388, %v449
        %v451 = vmul.u32 %v430, 2654435761
        %v452 = vrot.slane %v451, 5
        %v453 = vrot.slane %v452, 4
        %v454 = vxor.u32 %v388, %v453
        %v455 = vmul.f32 %v446, %v407
        %v456 = vadd.s32 %v450, %v413
        %v457 = vxor.u32 %v454, %v417
        %vm458 = vcmp.ge.s32.totalorder %v456, %v419
        %v459 = vsub.s32 %v456, %v419
        %v460 = vsel %vm458, %v459, %v456
        %v461 = vand.u32 %v457, %v423
        %v462 = vsel %vm428, %v461, %v460
        %v463 = vmul.f32 %v387, %v444
        %v464 = vadd.s32 %v430, %v449
        %v465 = vxor.u32 %v430, %v453
        %v466 = vmul.f32 %v463, %v407
        %v467 = vadd.s32 %v464, %v413
        %v468 = vxor.u32 %v465, %v417
        %vm469 = vcmp.ge.s32.totalorder %v467, %v419
        %v470 = vsub.s32 %v467, %v419
        %v471 = vsel %vm469, %v470, %v467
        %v472 = vand.u32 %v468, %v423
        %v473 = vsel %vm428, %v472, %v471
        %v474 = vrot.slane %v387, 6
        %v475 = vrot.slane %v474, 4
        %v477 = vmul.f32 %v396, %v475
        %v478 = vmul.u32 %v430, %v410
        %v479 = vrot.slane %v478, 6
        %v480 = vrot.slane %v479, 4
        %v481 = vadd.s32 %v401, %v480
        %v482 = vmul.u32 %v430, 805459861
        %v483 = vrot.slane %v482, 6
        %v484 = vrot.slane %v483, 4
        %v485 = vxor.u32 %v405, %v484
        %vm486 = vcmp.ge.s32.totalorder %v481, %v419
        %v487 = vsub.s32 %v481, %v419
        %v488 = vsel %vm486, %v487, %v481
        %v489 = vand.u32 %v485, %v423
        %v490 = vsel %vm428, %v489, %v488
        %v491 = vmul.f32 %v431, %v475
        %v492 = vadd.s32 %v432, %v480
        %v493 = vxor.u32 %v433, %v484
        %vm494 = vcmp.ge.s32.totalorder %v492, %v419
        %v495 = vsub.s32 %v492, %v419
        %v496 = vsel %vm494, %v495, %v492
        %v497 = vand.u32 %v493, %v423
        %v498 = vsel %vm428, %v497, %v496
        %v499 = vmul.f32 %v446, %v475
        %v500 = vadd.s32 %v450, %v480
        %v501 = vxor.u32 %v454, %v484
        %vm502 = vcmp.ge.s32.totalorder %v500, %v419
        %v503 = vsub.s32 %v500, %v419
        %v504 = vsel %vm502, %v503, %v500
        %v505 = vand.u32 %v501, %v423
        %v506 = vsel %vm428, %v505, %v504
        %v507 = vmul.f32 %v463, %v475
        %v508 = vadd.s32 %v464, %v480
        %v509 = vxor.u32 %v465, %v484
        %vm510 = vcmp.ge.s32.totalorder %v508, %v419
        %v511 = vsub.s32 %v508, %v419
        %v512 = vsel %vm510, %v511, %v508
        %v513 = vand.u32 %v509, %v423
        %v514 = vsel %vm428, %v513, %v512
        %v515 = vlaneseq
        %v516 = vshrl.u32 %v515, 7
        %v517 = vadd.s32 %v516, 8
        %v518 = vadd.s32 %v516, 16
        %v519 = vadd.s32 %v516, 24
        %v520 = vadd.s32 %v516, 32
        %v521 = vadd.s32 %v516, 40
        %v522 = vadd.s32 %v516, 48
        %v523 = vadd.s32 %v516, 56
        %v524 = vadd.s32 %v516, 64
        %v525 = vadd.s32 %v516, 72
        %v526 = vadd.s32 %v516, 80
        %v527 = vadd.s32 %v516, 88
        %v528 = vadd.s32 %v516, 96
        %v529 = vadd.s32 %v516, 104
        %v530 = vadd.s32 %v516, 112
        %v531 = vadd.s32 %v516, 120
        %532 = vst [vmem:[#allocation2] sm:$0xf] 0.0
        %s533 = sadd.s32 %s380, 127
        %p534 = scmp.lt.s32.totalorder %s533, 0
        %s535 = ssub.s32 0, %s533
        %s536 = scalar_select %p534, %s535, %s533
        %s537 = sshrl.u32 %s536, 7
        %s538 = ssub.s32 0, %s537
        %s539 = scalar_select %p534, %s538, %s537
        // While loop
        $region69: #{tpu_custom_call.1} parent=43 // loop_pre_header
          _
        $region70: #{tpu_custom_call.1} parent=43 // loop_header
          %s541 = sphi 0, %s543
          %p542 = scmp.ge.s32.totalorder %s541, %s539
        $region71: #{tpu_custom_call.1} parent=43 // loop_header_branch
          %545 = sbr.rel (%p542) target = $region75
        $region72: #{tpu_custom_call.1} parent=43 // loop_body
          %s546 = smul.u32 %s541, 128
          %v547 = vstv %s546
          %v548 = vsub.s32 %v429, %v547
          %v549 = vperm.slane %v548, 0
          %v550 = vperm.slane %v548, 4
          %v551 = vperm.slane %v549, 0
          %v552 = vperm.slane %v550, 0
          %vm553 = vcmp.eq.s32.totalorder %v516, %v551
          %vm554 = vcmp.eq.s32.totalorder %v516, %v552
          %vm555 = vcmp.eq.s32.totalorder %v517, %v551
          %vm556 = vcmp.eq.s32.totalorder %v517, %v552
          %vm557 = vcmp.eq.s32.totalorder %v518, %v551
          %vm558 = vcmp.eq.s32.totalorder %v518, %v552
          %vm559 = vcmp.eq.s32.totalorder %v519, %v551
          %vm560 = vcmp.eq.s32.totalorder %v519, %v552
          %vm561 = vcmp.eq.s32.totalorder %v520, %v551
          %vm562 = vcmp.eq.s32.totalorder %v520, %v552
          %vm563 = vcmp.eq.s32.totalorder %v521, %v551
          %vm564 = vcmp.eq.s32.totalorder %v521, %v552
          %vm565 = vcmp.eq.s32.totalorder %v522, %v551
          %vm566 = vcmp.eq.s32.totalorder %v522, %v552
          %vm567 = vcmp.eq.s32.totalorder %v523, %v551
          %vm568 = vcmp.eq.s32.totalorder %v523, %v552
          %vm569 = vcmp.eq.s32.totalorder %v524, %v551
          %vm570 = vcmp.eq.s32.totalorder %v524, %v552
          %vm571 = vcmp.eq.s32.totalorder %v525, %v551
          %vm572 = vcmp.eq.s32.totalorder %v525, %v552
          %vm573 = vcmp.eq.s32.totalorder %v526, %v551
          %vm574 = vcmp.eq.s32.totalorder %v526, %v552
          %vm575 = vcmp.eq.s32.totalorder %v527, %v551
          %vm576 = vcmp.eq.s32.totalorder %v527, %v552
          %vm577 = vcmp.eq.s32.totalorder %v528, %v551
          %vm578 = vcmp.eq.s32.totalorder %v528, %v552
          %vm579 = vcmp.eq.s32.totalorder %v529, %v551
          %vm580 = vcmp.eq.s32.totalorder %v529, %v552
          %vm581 = vcmp.eq.s32.totalorder %v530, %v551
          %vm582 = vcmp.eq.s32.totalorder %v530, %v552
          %vm583 = vcmp.eq.s32.totalorder %v531, %v551
          %vm584 = vcmp.eq.s32.totalorder %v531, %v552
          %v586 = vperm.slane %v409, 0
          %v587 = vperm.slane %v409, 4
          %v590 = vperm.slane %v586, 0
          %v591 = vperm.slane %v587, 0
          %v592 = vsel %vm553, %v590, 0.0
          %v593 = vsel %vm554, %v591, 0.0
          %v594 = vsel %vm555, %v590, 0.0
          %v595 = vsel %vm556, %v591, 0.0
          %v596 = vsel %vm557, %v590, 0.0
          %v597 = vsel %vm558, %v591, 0.0
          %v598 = vsel %vm559, %v590, 0.0
          %v599 = vsel %vm560, %v591, 0.0
          %v600 = vsel %vm561, %v590, 0.0
          %v601 = vsel %vm562, %v591, 0.0
          %v602 = vsel %vm563, %v590, 0.0
          %v603 = vsel %vm564, %v591, 0.0
          %v604 = vsel %vm565, %v590, 0.0
          %v605 = vsel %vm566, %v591, 0.0
          %v606 = vsel %vm567, %v590, 0.0
          %v607 = vsel %vm568, %v591, 0.0
          %v608 = vsel %vm569, %v590, 0.0
          %v609 = vsel %vm570, %v591, 0.0
          %v610 = vsel %vm571, %v590, 0.0
          %v611 = vsel %vm572, %v591, 0.0
          %v612 = vsel %vm573, %v590, 0.0
          %v613 = vsel %vm574, %v591, 0.0
          %v614 = vsel %vm575, %v590, 0.0
          %v615 = vsel %vm576, %v591, 0.0
          %v616 = vsel %vm577, %v590, 0.0
          %v617 = vsel %vm578, %v591, 0.0
          %v618 = vsel %vm579, %v590, 0.0
          %v619 = vsel %vm580, %v591, 0.0
          %v620 = vsel %vm581, %v590, 0.0
          %v621 = vsel %vm582, %v591, 0.0
          %v622 = vsel %vm583, %v590, 0.0
          %v623 = vsel %vm584, %v591, 0.0
          %v624 = vsub.s32 %v441, %v547
          %v625 = vperm.slane %v624, 0
          %v626 = vperm.slane %v624, 4
          %v627 = vperm.slane %v625, 0
          %v628 = vperm.slane %v626, 0
          %vm629 = vcmp.eq.s32.totalorder %v516, %v627
          %vm630 = vcmp.eq.s32.totalorder %v516, %v628
          %vm631 = vcmp.eq.s32.totalorder %v517, %v627
          %vm632 = vcmp.eq.s32.totalorder %v517, %v628
          %vm633 = vcmp.eq.s32.totalorder %v518, %v627
          %vm634 = vcmp.eq.s32.totalorder %v518, %v628
          %vm635 = vcmp.eq.s32.totalorder %v519, %v627
          %vm636 = vcmp.eq.s32.totalorder %v519, %v628
          %vm637 = vcmp.eq.s32.totalorder %v520, %v627
          %vm638 = vcmp.eq.s32.totalorder %v520, %v628
          %vm639 = vcmp.eq.s32.totalorder %v521, %v627
          %vm640 = vcmp.eq.s32.totalorder %v521, %v628
          %vm641 = vcmp.eq.s32.totalorder %v522, %v627
          %vm642 = vcmp.eq.s32.totalorder %v522, %v628
          %vm643 = vcmp.eq.s32.totalorder %v523, %v627
          %vm644 = vcmp.eq.s32.totalorder %v523, %v628
          %vm645 = vcmp.eq.s32.totalorder %v524, %v627
          %vm646 = vcmp.eq.s32.totalorder %v524, %v628
          %vm647 = vcmp.eq.s32.totalorder %v525, %v627
          %vm648 = vcmp.eq.s32.totalorder %v525, %v628
          %vm649 = vcmp.eq.s32.totalorder %v526, %v627
          %vm650 = vcmp.eq.s32.totalorder %v526, %v628
          %vm651 = vcmp.eq.s32.totalorder %v527, %v627
          %vm652 = vcmp.eq.s32.totalorder %v527, %v628
          %vm653 = vcmp.eq.s32.totalorder %v528, %v627
          %vm654 = vcmp.eq.s32.totalorder %v528, %v628
          %vm655 = vcmp.eq.s32.totalorder %v529, %v627
          %vm656 = vcmp.eq.s32.totalorder %v529, %v628
          %vm657 = vcmp.eq.s32.totalorder %v530, %v627
          %vm658 = vcmp.eq.s32.totalorder %v530, %v628
          %vm659 = vcmp.eq.s32.totalorder %v531, %v627
          %vm660 = vcmp.eq.s32.totalorder %v531, %v628
          %v662 = vperm.slane %v434, 0
          %v663 = vperm.slane %v434, 4
          %v666 = vperm.slane %v662, 0
          %v667 = vperm.slane %v663, 0
          %v668 = vsel %vm629, %v666, 0.0
          %v669 = vsel %vm630, %v667, 0.0
          %v670 = vsel %vm631, %v666, 0.0
          %v671 = vsel %vm632, %v667, 0.0
          %v672 = vsel %vm633, %v666, 0.0
          %v673 = vsel %vm634, %v667, 0.0
          %v674 = vsel %vm635, %v666, 0.0
          %v675 = vsel %vm636, %v667, 0.0
          %v676 = vsel %vm637, %v666, 0.0
          %v677 = vsel %vm638, %v667, 0.0
          %v678 = vsel %vm639, %v666, 0.0
          %v679 = vsel %vm640, %v667, 0.0
          %v680 = vsel %vm641, %v666, 0.0
          %v681 = vsel %vm642, %v667, 0.0
          %v682 = vsel %vm643, %v666, 0.0
          %v683 = vsel %vm644, %v667, 0.0
          %v684 = vsel %vm645, %v666, 0.0
          %v685 = vsel %vm646, %v667, 0.0
          %v686 = vsel %vm647, %v666, 0.0
          %v687 = vsel %vm648, %v667, 0.0
          %v688 = vsel %vm649, %v666, 0.0
          %v689 = vsel %vm650, %v667, 0.0
          %v690 = vsel %vm651, %v666, 0.0
          %v691 = vsel %vm652, %v667, 0.0
          %v692 = vsel %vm653, %v666, 0.0
          %v693 = vsel %vm654, %v667, 0.0
          %v694 = vsel %vm655, %v666, 0.0
          %v695 = vsel %vm656, %v667, 0.0
          %v696 = vsel %vm657, %v666, 0.0
          %v697 = vsel %vm658, %v667, 0.0
          %v698 = vsel %vm659, %v666, 0.0
          %v699 = vsel %vm660, %v667, 0.0
          %v700 = vadd.f32 %v592, %v668
          %v701 = vadd.f32 %v593, %v669
          %v702 = vadd.f32 %v594, %v670
          %v703 = vadd.f32 %v595, %v671
          %v704 = vadd.f32 %v596, %v672
          %v705 = vadd.f32 %v597, %v673
          %v706 = vadd.f32 %v598, %v674
          %v707 = vadd.f32 %v599, %v675
          %v708 = vadd.f32 %v600, %v676
          %v709 = vadd.f32 %v601, %v677
          %v710 = vadd.f32 %v602, %v678
          %v711 = vadd.f32 %v603, %v679
          %v712 = vadd.f32 %v604, %v680
          %v713 = vadd.f32 %v605, %v681
          %v714 = vadd.f32 %v606, %v682
          %v715 = vadd.f32 %v607, %v683
          %v716 = vadd.f32 %v608, %v684
          %v717 = vadd.f32 %v609, %v685
          %v718 = vadd.f32 %v610, %v686
          %v719 = vadd.f32 %v611, %v687
          %v720 = vadd.f32 %v612, %v688
          %v721 = vadd.f32 %v613, %v689
          %v722 = vadd.f32 %v614, %v690
          %v723 = vadd.f32 %v615, %v691
          %v724 = vadd.f32 %v616, %v692
          %v725 = vadd.f32 %v617, %v693
          %v726 = vadd.f32 %v618, %v694
          %v727 = vadd.f32 %v619, %v695
          %v728 = vadd.f32 %v620, %v696
          %v729 = vadd.f32 %v621, %v697
          %v730 = vadd.f32 %v622, %v698
          %v731 = vadd.f32 %v623, %v699
          %v732 = vsub.s32 %v462, %v547
          %v733 = vperm.slane %v732, 0
          %v734 = vperm.slane %v732, 4
          %v735 = vperm.slane %v733, 0
          %v736 = vperm.slane %v734, 0
          %vm737 = vcmp.eq.s32.totalorder %v516, %v735
          %vm738 = vcmp.eq.s32.totalorder %v516, %v736
          %vm739 = vcmp.eq.s32.totalorder %v517, %v735
          %vm740 = vcmp.eq.s32.totalorder %v517, %v736
          %vm741 = vcmp.eq.s32.totalorder %v518, %v735
          %vm742 = vcmp.eq.s32.totalorder %v518, %v736
          %vm743 = vcmp.eq.s32.totalorder %v519, %v735
          %vm744 = vcmp.eq.s32.totalorder %v519, %v736
          %vm745 = vcmp.eq.s32.totalorder %v520, %v735
          %vm746 = vcmp.eq.s32.totalorder %v520, %v736
          %vm747 = vcmp.eq.s32.totalorder %v521, %v735
          %vm748 = vcmp.eq.s32.totalorder %v521, %v736
          %vm749 = vcmp.eq.s32.totalorder %v522, %v735
          %vm750 = vcmp.eq.s32.totalorder %v522, %v736
          %vm751 = vcmp.eq.s32.totalorder %v523, %v735
          %vm752 = vcmp.eq.s32.totalorder %v523, %v736
          %vm753 = vcmp.eq.s32.totalorder %v524, %v735
          %vm754 = vcmp.eq.s32.totalorder %v524, %v736
          %vm755 = vcmp.eq.s32.totalorder %v525, %v735
          %vm756 = vcmp.eq.s32.totalorder %v525, %v736
          %vm757 = vcmp.eq.s32.totalorder %v526, %v735
          %vm758 = vcmp.eq.s32.totalorder %v526, %v736
          %vm759 = vcmp.eq.s32.totalorder %v527, %v735
          %vm760 = vcmp.eq.s32.totalorder %v527, %v736
          %vm761 = vcmp.eq.s32.totalorder %v528, %v735
          %vm762 = vcmp.eq.s32.totalorder %v528, %v736
          %vm763 = vcmp.eq.s32.totalorder %v529, %v735
          %vm764 = vcmp.eq.s32.totalorder %v529, %v736
          %vm765 = vcmp.eq.s32.totalorder %v530, %v735
          %vm766 = vcmp.eq.s32.totalorder %v530, %v736
          %vm767 = vcmp.eq.s32.totalorder %v531, %v735
          %vm768 = vcmp.eq.s32.totalorder %v531, %v736
          %v770 = vperm.slane %v455, 0
          %v771 = vperm.slane %v455, 4
          %v774 = vperm.slane %v770, 0
          %v775 = vperm.slane %v771, 0
          %v776 = vsel %vm737, %v774, 0.0
          %v777 = vsel %vm738, %v775, 0.0
          %v778 = vsel %vm739, %v774, 0.0
          %v779 = vsel %vm740, %v775, 0.0
          %v780 = vsel %vm741, %v774, 0.0
          %v781 = vsel %vm742, %v775, 0.0
          %v782 = vsel %vm743, %v774, 0.0
          %v783 = vsel %vm744, %v775, 0.0
          %v784 = vsel %vm745, %v774, 0.0
          %v785 = vsel %vm746, %v775, 0.0
          %v786 = vsel %vm747, %v774, 0.0
          %v787 = vsel %vm748, %v775, 0.0
          %v788 = vsel %vm749, %v774, 0.0
          %v789 = vsel %vm750, %v775, 0.0
          %v790 = vsel %vm751, %v774, 0.0
          %v791 = vsel %vm752, %v775, 0.0
          %v792 = vsel %vm753, %v774, 0.0
          %v793 = vsel %vm754, %v775, 0.0
          %v794 = vsel %vm755, %v774, 0.0
          %v795 = vsel %vm756, %v775, 0.0
          %v796 = vsel %vm757, %v774, 0.0
          %v797 = vsel %vm758, %v775, 0.0
          %v798 = vsel %vm759, %v774, 0.0
          %v799 = vsel %vm760, %v775, 0.0
          %v800 = vsel %vm761, %v774, 0.0
          %v801 = vsel %vm762, %v775, 0.0
          %v802 = vsel %vm763, %v774, 0.0
          %v803 = vsel %vm764, %v775, 0.0
          %v804 = vsel %vm765, %v774, 0.0
          %v805 = vsel %vm766, %v775, 0.0
          %v806 = vsel %vm767, %v774, 0.0
          %v807 = vsel %vm768, %v775, 0.0
          %v808 = vadd.f32 %v700, %v776
          %v809 = vadd.f32 %v701, %v777
          %v810 = vadd.f32 %v702, %v778
          %v811 = vadd.f32 %v703, %v779
          %v812 = vadd.f32 %v704, %v780
          %v813 = vadd.f32 %v705, %v781
          %v814 = vadd.f32 %v706, %v782
          %v815 = vadd.f32 %v707, %v783
          %v816 = vadd.f32 %v708, %v784
          %v817 = vadd.f32 %v709, %v785
          %v818 = vadd.f32 %v710, %v786
          %v819 = vadd.f32 %v711, %v787
          %v820 = vadd.f32 %v712, %v788
          %v821 = vadd.f32 %v713, %v789
          %v822 = vadd.f32 %v714, %v790
          %v823 = vadd.f32 %v715, %v791
          %v824 = vadd.f32 %v716, %v792
          %v825 = vadd.f32 %v717, %v793
          %v826 = vadd.f32 %v718, %v794
          %v827 = vadd.f32 %v719, %v795
          %v828 = vadd.f32 %v720, %v796
          %v829 = vadd.f32 %v721, %v797
          %v830 = vadd.f32 %v722, %v798
          %v831 = vadd.f32 %v723, %v799
          %v832 = vadd.f32 %v724, %v800
          %v833 = vadd.f32 %v725, %v801
          %v834 = vadd.f32 %v726, %v802
          %v835 = vadd.f32 %v727, %v803
          %v836 = vadd.f32 %v728, %v804
          %v837 = vadd.f32 %v729, %v805
          %v838 = vadd.f32 %v730, %v806
          %v839 = vadd.f32 %v731, %v807
          %v840 = vsub.s32 %v473, %v547
          %v841 = vperm.slane %v840, 0
          %v842 = vperm.slane %v840, 4
          %v843 = vperm.slane %v841, 0
          %v844 = vperm.slane %v842, 0
          %vm845 = vcmp.eq.s32.totalorder %v516, %v843
          %vm846 = vcmp.eq.s32.totalorder %v516, %v844
          %vm847 = vcmp.eq.s32.totalorder %v517, %v843
          %vm848 = vcmp.eq.s32.totalorder %v517, %v844
          %vm849 = vcmp.eq.s32.totalorder %v518, %v843
          %vm850 = vcmp.eq.s32.totalorder %v518, %v844
          %vm851 = vcmp.eq.s32.totalorder %v519, %v843
          %vm852 = vcmp.eq.s32.totalorder %v519, %v844
          %vm853 = vcmp.eq.s32.totalorder %v520, %v843
          %vm854 = vcmp.eq.s32.totalorder %v520, %v844
          %vm855 = vcmp.eq.s32.totalorder %v521, %v843
          %vm856 = vcmp.eq.s32.totalorder %v521, %v844
          %vm857 = vcmp.eq.s32.totalorder %v522, %v843
          %vm858 = vcmp.eq.s32.totalorder %v522, %v844
          %vm859 = vcmp.eq.s32.totalorder %v523, %v843
          %vm860 = vcmp.eq.s32.totalorder %v523, %v844
          %vm861 = vcmp.eq.s32.totalorder %v524, %v843
          %vm862 = vcmp.eq.s32.totalorder %v524, %v844
          %vm863 = vcmp.eq.s32.totalorder %v525, %v843
          %vm864 = vcmp.eq.s32.totalorder %v525, %v844
          %vm865 = vcmp.eq.s32.totalorder %v526, %v843
          %vm866 = vcmp.eq.s32.totalorder %v526, %v844
          %vm867 = vcmp.eq.s32.totalorder %v527, %v843
          %vm868 = vcmp.eq.s32.totalorder %v527, %v844
          %vm869 = vcmp.eq.s32.totalorder %v528, %v843
          %vm870 = vcmp.eq.s32.totalorder %v528, %v844
          %vm871 = vcmp.eq.s32.totalorder %v529, %v843
          %vm872 = vcmp.eq.s32.totalorder %v529, %v844
          %vm873 = vcmp.eq.s32.totalorder %v530, %v843
          %vm874 = vcmp.eq.s32.totalorder %v530, %v844
          %vm875 = vcmp.eq.s32.totalorder %v531, %v843
          %vm876 = vcmp.eq.s32.totalorder %v531, %v844
          %v878 = vperm.slane %v466, 0
          %v879 = vperm.slane %v466, 4
          %v882 = vperm.slane %v878, 0
          %v883 = vperm.slane %v879, 0
          %v884 = vsel %vm845, %v882, 0.0
          %v885 = vsel %vm846, %v883, 0.0
          %v886 = vsel %vm847, %v882, 0.0
          %v887 = vsel %vm848, %v883, 0.0
          %v888 = vsel %vm849, %v882, 0.0
          %v889 = vsel %vm850, %v883, 0.0
          %v890 = vsel %vm851, %v882, 0.0
          %v891 = vsel %vm852, %v883, 0.0
          %v892 = vsel %vm853, %v882, 0.0
          %v893 = vsel %vm854, %v883, 0.0
          %v894 = vsel %vm855, %v882, 0.0
          %v895 = vsel %vm856, %v883, 0.0
          %v896 = vsel %vm857, %v882, 0.0
          %v897 = vsel %vm858, %v883, 0.0
          %v898 = vsel %vm859, %v882, 0.0
          %v899 = vsel %vm860, %v883, 0.0
          %v900 = vsel %vm861, %v882, 0.0
          %v901 = vsel %vm862, %v883, 0.0
          %v902 = vsel %vm863, %v882, 0.0
          %v903 = vsel %vm864, %v883, 0.0
          %v904 = vsel %vm865, %v882, 0.0
          %v905 = vsel %vm866, %v883, 0.0
          %v906 = vsel %vm867, %v882, 0.0
          %v907 = vsel %vm868, %v883, 0.0
          %v908 = vsel %vm869, %v882, 0.0
          %v909 = vsel %vm870, %v883, 0.0
          %v910 = vsel %vm871, %v882, 0.0
          %v911 = vsel %vm872, %v883, 0.0
          %v912 = vsel %vm873, %v882, 0.0
          %v913 = vsel %vm874, %v883, 0.0
          %v914 = vsel %vm875, %v882, 0.0
          %v915 = vsel %vm876, %v883, 0.0
          %v916 = vadd.f32 %v808, %v884
          %v917 = vadd.f32 %v809, %v885
          %v918 = vadd.f32 %v810, %v886
          %v919 = vadd.f32 %v811, %v887
          %v920 = vadd.f32 %v812, %v888
          %v921 = vadd.f32 %v813, %v889
          %v922 = vadd.f32 %v814, %v890
          %v923 = vadd.f32 %v815, %v891
          %v924 = vadd.f32 %v816, %v892
          %v925 = vadd.f32 %v817, %v893
          %v926 = vadd.f32 %v818, %v894
          %v927 = vadd.f32 %v819, %v895
          %v928 = vadd.f32 %v820, %v896
          %v929 = vadd.f32 %v821, %v897
          %v930 = vadd.f32 %v822, %v898
          %v931 = vadd.f32 %v823, %v899
          %v932 = vadd.f32 %v824, %v900
          %v933 = vadd.f32 %v825, %v901
          %v934 = vadd.f32 %v826, %v902
          %v935 = vadd.f32 %v827, %v903
          %v936 = vadd.f32 %v828, %v904
          %v937 = vadd.f32 %v829, %v905
          %v938 = vadd.f32 %v830, %v906
          %v939 = vadd.f32 %v831, %v907
          %v940 = vadd.f32 %v832, %v908
          %v941 = vadd.f32 %v833, %v909
          %v942 = vadd.f32 %v834, %v910
          %v943 = vadd.f32 %v835, %v911
          %v944 = vadd.f32 %v836, %v912
          %v945 = vadd.f32 %v837, %v913
          %v946 = vadd.f32 %v838, %v914
          %v947 = vadd.f32 %v839, %v915
          %v948 = vsub.s32 %v490, %v547
          %v949 = vperm.slane %v948, 0
          %v950 = vperm.slane %v948, 4
          %v951 = vperm.slane %v949, 0
          %v952 = vperm.slane %v950, 0
          %vm953 = vcmp.eq.s32.totalorder %v516, %v951
          %vm954 = vcmp.eq.s32.totalorder %v516, %v952
          %vm955 = vcmp.eq.s32.totalorder %v517, %v951
          %vm956 = vcmp.eq.s32.totalorder %v517, %v952
          %vm957 = vcmp.eq.s32.totalorder %v518, %v951
          %vm958 = vcmp.eq.s32.totalorder %v518, %v952
          %vm959 = vcmp.eq.s32.totalorder %v519, %v951
          %vm960 = vcmp.eq.s32.totalorder %v519, %v952
          %vm961 = vcmp.eq.s32.totalorder %v520, %v951
          %vm962 = vcmp.eq.s32.totalorder %v520, %v952
          %vm963 = vcmp.eq.s32.totalorder %v521, %v951
          %vm964 = vcmp.eq.s32.totalorder %v521, %v952
          %vm965 = vcmp.eq.s32.totalorder %v522, %v951
          %vm966 = vcmp.eq.s32.totalorder %v522, %v952
          %vm967 = vcmp.eq.s32.totalorder %v523, %v951
          %vm968 = vcmp.eq.s32.totalorder %v523, %v952
          %vm969 = vcmp.eq.s32.totalorder %v524, %v951
          %vm970 = vcmp.eq.s32.totalorder %v524, %v952
          %vm971 = vcmp.eq.s32.totalorder %v525, %v951
          %vm972 = vcmp.eq.s32.totalorder %v525, %v952
          %vm973 = vcmp.eq.s32.totalorder %v526, %v951
          %vm974 = vcmp.eq.s32.totalorder %v526, %v952
          %vm975 = vcmp.eq.s32.totalorder %v527, %v951
          %vm976 = vcmp.eq.s32.totalorder %v527, %v952
          %vm977 = vcmp.eq.s32.totalorder %v528, %v951
          %vm978 = vcmp.eq.s32.totalorder %v528, %v952
          %vm979 = vcmp.eq.s32.totalorder %v529, %v951
          %vm980 = vcmp.eq.s32.totalorder %v529, %v952
          %vm981 = vcmp.eq.s32.totalorder %v530, %v951
          %vm982 = vcmp.eq.s32.totalorder %v530, %v952
          %vm983 = vcmp.eq.s32.totalorder %v531, %v951
          %vm984 = vcmp.eq.s32.totalorder %v531, %v952
          %v986 = vperm.slane %v477, 0
          %v987 = vperm.slane %v477, 4
          %v990 = vperm.slane %v986, 0
          %v991 = vperm.slane %v987, 0
          %v992 = vsel %vm953, %v990, 0.0
          %v993 = vsel %vm954, %v991, 0.0
          %v994 = vsel %vm955, %v990, 0.0
          %v995 = vsel %vm956, %v991, 0.0
          %v996 = vsel %vm957, %v990, 0.0
          %v997 = vsel %vm958, %v991, 0.0
          %v998 = vsel %vm959, %v990, 0.0
          %v999 = vsel %vm960, %v991, 0.0
          %v1000 = vsel %vm961, %v990, 0.0
          %v1001 = vsel %vm962, %v991, 0.0
          %v1002 = vsel %vm963, %v990, 0.0
          %v1003 = vsel %vm964, %v991, 0.0
          %v1004 = vsel %vm965, %v990, 0.0
          %v1005 = vsel %vm966, %v991, 0.0
          %v1006 = vsel %vm967, %v990, 0.0
          %v1007 = vsel %vm968, %v991, 0.0
          %v1008 = vsel %vm969, %v990, 0.0
          %v1009 = vsel %vm970, %v991, 0.0
          %v1010 = vsel %vm971, %v990, 0.0
          %v1011 = vsel %vm972, %v991, 0.0
          %v1012 = vsel %vm973, %v990, 0.0
          %v1013 = vsel %vm974, %v991, 0.0
          %v1014 = vsel %vm975, %v990, 0.0
          %v1015 = vsel %vm976, %v991, 0.0
          %v1016 = vsel %vm977, %v990, 0.0
          %v1017 = vsel %vm978, %v991, 0.0
          %v1018 = vsel %vm979, %v990, 0.0
          %v1019 = vsel %vm980, %v991, 0.0
          %v1020 = vsel %vm981, %v990, 0.0
          %v1021 = vsel %vm982, %v991, 0.0
          %v1022 = vsel %vm983, %v990, 0.0
          %v1023 = vsel %vm984, %v991, 0.0
          %v1024 = vadd.f32 %v916, %v992
          %v1025 = vadd.f32 %v917, %v993
          %v1026 = vadd.f32 %v918, %v994
          %v1027 = vadd.f32 %v919, %v995
          %v1028 = vadd.f32 %v920, %v996
          %v1029 = vadd.f32 %v921, %v997
          %v1030 = vadd.f32 %v922, %v998
          %v1031 = vadd.f32 %v923, %v999
          %v1032 = vadd.f32 %v924, %v1000
          %v1033 = vadd.f32 %v925, %v1001
          %v1034 = vadd.f32 %v926, %v1002
          %v1035 = vadd.f32 %v927, %v1003
          %v1036 = vadd.f32 %v928, %v1004
          %v1037 = vadd.f32 %v929, %v1005
          %v1038 = vadd.f32 %v930, %v1006
          %v1039 = vadd.f32 %v931, %v1007
          %v1040 = vadd.f32 %v932, %v1008
          %v1041 = vadd.f32 %v933, %v1009
          %v1042 = vadd.f32 %v934, %v1010
          %v1043 = vadd.f32 %v935, %v1011
          %v1044 = vadd.f32 %v936, %v1012
          %v1045 = vadd.f32 %v937, %v1013
          %v1046 = vadd.f32 %v938, %v1014
          %v1047 = vadd.f32 %v939, %v1015
          %v1048 = vadd.f32 %v940, %v1016
          %v1049 = vadd.f32 %v941, %v1017
          %v1050 = vadd.f32 %v942, %v1018
          %v1051 = vadd.f32 %v943, %v1019
          %v1052 = vadd.f32 %v944, %v1020
          %v1053 = vadd.f32 %v945, %v1021
          %v1054 = vadd.f32 %v946, %v1022
          %v1055 = vadd.f32 %v947, %v1023
          %v1056 = vsub.s32 %v498, %v547
          %v1057 = vperm.slane %v1056, 0
          %v1058 = vperm.slane %v1056, 4
          %v1059 = vperm.slane %v1057, 0
          %v1060 = vperm.slane %v1058, 0
          %vm1061 = vcmp.eq.s32.totalorder %v516, %v1059
          %vm1062 = vcmp.eq.s32.totalorder %v516, %v1060
          %vm1063 = vcmp.eq.s32.totalorder %v517, %v1059
          %vm1064 = vcmp.eq.s32.totalorder %v517, %v1060
          %vm1065 = vcmp.eq.s32.totalorder %v518, %v1059
          %vm1066 = vcmp.eq.s32.totalorder %v518, %v1060
          %vm1067 = vcmp.eq.s32.totalorder %v519, %v1059
          %vm1068 = vcmp.eq.s32.totalorder %v519, %v1060
          %vm1069 = vcmp.eq.s32.totalorder %v520, %v1059
          %vm1070 = vcmp.eq.s32.totalorder %v520, %v1060
          %vm1071 = vcmp.eq.s32.totalorder %v521, %v1059
          %vm1072 = vcmp.eq.s32.totalorder %v521, %v1060
          %vm1073 = vcmp.eq.s32.totalorder %v522, %v1059
          %vm1074 = vcmp.eq.s32.totalorder %v522, %v1060
          %vm1075 = vcmp.eq.s32.totalorder %v523, %v1059
          %vm1076 = vcmp.eq.s32.totalorder %v523, %v1060
          %vm1077 = vcmp.eq.s32.totalorder %v524, %v1059
          %vm1078 = vcmp.eq.s32.totalorder %v524, %v1060
          %vm1079 = vcmp.eq.s32.totalorder %v525, %v1059
          %vm1080 = vcmp.eq.s32.totalorder %v525, %v1060
          %vm1081 = vcmp.eq.s32.totalorder %v526, %v1059
          %vm1082 = vcmp.eq.s32.totalorder %v526, %v1060
          %vm1083 = vcmp.eq.s32.totalorder %v527, %v1059
          %vm1084 = vcmp.eq.s32.totalorder %v527, %v1060
          %vm1085 = vcmp.eq.s32.totalorder %v528, %v1059
          %vm1086 = vcmp.eq.s32.totalorder %v528, %v1060
          %vm1087 = vcmp.eq.s32.totalorder %v529, %v1059
          %vm1088 = vcmp.eq.s32.totalorder %v529, %v1060
          %vm1089 = vcmp.eq.s32.totalorder %v530, %v1059
          %vm1090 = vcmp.eq.s32.totalorder %v530, %v1060
          %vm1091 = vcmp.eq.s32.totalorder %v531, %v1059
          %vm1092 = vcmp.eq.s32.totalorder %v531, %v1060
          %v1094 = vperm.slane %v491, 0
          %v1095 = vperm.slane %v491, 4
          %v1098 = vperm.slane %v1094, 0
          %v1099 = vperm.slane %v1095, 0
          %v1100 = vsel %vm1061, %v1098, 0.0
          %v1101 = vsel %vm1062, %v1099, 0.0
          %v1102 = vsel %vm1063, %v1098, 0.0
          %v1103 = vsel %vm1064, %v1099, 0.0
          %v1104 = vsel %vm1065, %v1098, 0.0
          %v1105 = vsel %vm1066, %v1099, 0.0
          %v1106 = vsel %vm1067, %v1098, 0.0
          %v1107 = vsel %vm1068, %v1099, 0.0
          %v1108 = vsel %vm1069, %v1098, 0.0
          %v1109 = vsel %vm1070, %v1099, 0.0
          %v1110 = vsel %vm1071, %v1098, 0.0
          %v1111 = vsel %vm1072, %v1099, 0.0
          %v1112 = vsel %vm1073, %v1098, 0.0
          %v1113 = vsel %vm1074, %v1099, 0.0
          %v1114 = vsel %vm1075, %v1098, 0.0
          %v1115 = vsel %vm1076, %v1099, 0.0
          %v1116 = vsel %vm1077, %v1098, 0.0
          %v1117 = vsel %vm1078, %v1099, 0.0
          %v1118 = vsel %vm1079, %v1098, 0.0
          %v1119 = vsel %vm1080, %v1099, 0.0
          %v1120 = vsel %vm1081, %v1098, 0.0
          %v1121 = vsel %vm1082, %v1099, 0.0
          %v1122 = vsel %vm1083, %v1098, 0.0
          %v1123 = vsel %vm1084, %v1099, 0.0
          %v1124 = vsel %vm1085, %v1098, 0.0
          %v1125 = vsel %vm1086, %v1099, 0.0
          %v1126 = vsel %vm1087, %v1098, 0.0
          %v1127 = vsel %vm1088, %v1099, 0.0
          %v1128 = vsel %vm1089, %v1098, 0.0
          %v1129 = vsel %vm1090, %v1099, 0.0
          %v1130 = vsel %vm1091, %v1098, 0.0
          %v1131 = vsel %vm1092, %v1099, 0.0
          %v1132 = vadd.f32 %v1024, %v1100
          %v1133 = vadd.f32 %v1025, %v1101
          %v1134 = vadd.f32 %v1026, %v1102
          %v1135 = vadd.f32 %v1027, %v1103
          %v1136 = vadd.f32 %v1028, %v1104
          %v1137 = vadd.f32 %v1029, %v1105
          %v1138 = vadd.f32 %v1030, %v1106
          %v1139 = vadd.f32 %v1031, %v1107
          %v1140 = vadd.f32 %v1032, %v1108
          %v1141 = vadd.f32 %v1033, %v1109
          %v1142 = vadd.f32 %v1034, %v1110
          %v1143 = vadd.f32 %v1035, %v1111
          %v1144 = vadd.f32 %v1036, %v1112
          %v1145 = vadd.f32 %v1037, %v1113
          %v1146 = vadd.f32 %v1038, %v1114
          %v1147 = vadd.f32 %v1039, %v1115
          %v1148 = vadd.f32 %v1040, %v1116
          %v1149 = vadd.f32 %v1041, %v1117
          %v1150 = vadd.f32 %v1042, %v1118
          %v1151 = vadd.f32 %v1043, %v1119
          %v1152 = vadd.f32 %v1044, %v1120
          %v1153 = vadd.f32 %v1045, %v1121
          %v1154 = vadd.f32 %v1046, %v1122
          %v1155 = vadd.f32 %v1047, %v1123
          %v1156 = vadd.f32 %v1048, %v1124
          %v1157 = vadd.f32 %v1049, %v1125
          %v1158 = vadd.f32 %v1050, %v1126
          %v1159 = vadd.f32 %v1051, %v1127
          %v1160 = vadd.f32 %v1052, %v1128
          %v1161 = vadd.f32 %v1053, %v1129
          %v1162 = vadd.f32 %v1054, %v1130
          %v1163 = vadd.f32 %v1055, %v1131
          %v1164 = vsub.s32 %v506, %v547
          %v1165 = vperm.slane %v1164, 0
          %v1166 = vperm.slane %v1164, 4
          %v1167 = vperm.slane %v1165, 0
          %v1168 = vperm.slane %v1166, 0
          %vm1169 = vcmp.eq.s32.totalorder %v516, %v1167
          %vm1170 = vcmp.eq.s32.totalorder %v516, %v1168
          %vm1171 = vcmp.eq.s32.totalorder %v517, %v1167
          %vm1172 = vcmp.eq.s32.totalorder %v517, %v1168
          %vm1173 = vcmp.eq.s32.totalorder %v518, %v1167
          %vm1174 = vcmp.eq.s32.totalorder %v518, %v1168
          %vm1175 = vcmp.eq.s32.totalorder %v519, %v1167
          %vm1176 = vcmp.eq.s32.totalorder %v519, %v1168
          %vm1177 = vcmp.eq.s32.totalorder %v520, %v1167
          %vm1178 = vcmp.eq.s32.totalorder %v520, %v1168
          %vm1179 = vcmp.eq.s32.totalorder %v521, %v1167
          %vm1180 = vcmp.eq.s32.totalorder %v521, %v1168
          %vm1181 = vcmp.eq.s32.totalorder %v522, %v1167
          %vm1182 = vcmp.eq.s32.totalorder %v522, %v1168
          %vm1183 = vcmp.eq.s32.totalorder %v523, %v1167
          %vm1184 = vcmp.eq.s32.totalorder %v523, %v1168
          %vm1185 = vcmp.eq.s32.totalorder %v524, %v1167
          %vm1186 = vcmp.eq.s32.totalorder %v524, %v1168
          %vm1187 = vcmp.eq.s32.totalorder %v525, %v1167
          %vm1188 = vcmp.eq.s32.totalorder %v525, %v1168
          %vm1189 = vcmp.eq.s32.totalorder %v526, %v1167
          %vm1190 = vcmp.eq.s32.totalorder %v526, %v1168
          %vm1191 = vcmp.eq.s32.totalorder %v527, %v1167
          %vm1192 = vcmp.eq.s32.totalorder %v527, %v1168
          %vm1193 = vcmp.eq.s32.totalorder %v528, %v1167
          %vm1194 = vcmp.eq.s32.totalorder %v528, %v1168
          %vm1195 = vcmp.eq.s32.totalorder %v529, %v1167
          %vm1196 = vcmp.eq.s32.totalorder %v529, %v1168
          %vm1197 = vcmp.eq.s32.totalorder %v530, %v1167
          %vm1198 = vcmp.eq.s32.totalorder %v530, %v1168
          %vm1199 = vcmp.eq.s32.totalorder %v531, %v1167
          %vm1200 = vcmp.eq.s32.totalorder %v531, %v1168
          %v1202 = vperm.slane %v499, 0
          %v1203 = vperm.slane %v499, 4
          %v1206 = vperm.slane %v1202, 0
          %v1207 = vperm.slane %v1203, 0
          %v1208 = vsel %vm1169, %v1206, 0.0
          %v1209 = vsel %vm1170, %v1207, 0.0
          %v1210 = vsel %vm1171, %v1206, 0.0
          %v1211 = vsel %vm1172, %v1207, 0.0
          %v1212 = vsel %vm1173, %v1206, 0.0
          %v1213 = vsel %vm1174, %v1207, 0.0
          %v1214 = vsel %vm1175, %v1206, 0.0
          %v1215 = vsel %vm1176, %v1207, 0.0
          %v1216 = vsel %vm1177, %v1206, 0.0
          %v1217 = vsel %vm1178, %v1207, 0.0
          %v1218 = vsel %vm1179, %v1206, 0.0
          %v1219 = vsel %vm1180, %v1207, 0.0
          %v1220 = vsel %vm1181, %v1206, 0.0
          %v1221 = vsel %vm1182, %v1207, 0.0
          %v1222 = vsel %vm1183, %v1206, 0.0
          %v1223 = vsel %vm1184, %v1207, 0.0
          %v1224 = vsel %vm1185, %v1206, 0.0
          %v1225 = vsel %vm1186, %v1207, 0.0
          %v1226 = vsel %vm1187, %v1206, 0.0
          %v1227 = vsel %vm1188, %v1207, 0.0
          %v1228 = vsel %vm1189, %v1206, 0.0
          %v1229 = vsel %vm1190, %v1207, 0.0
          %v1230 = vsel %vm1191, %v1206, 0.0
          %v1231 = vsel %vm1192, %v1207, 0.0
          %v1232 = vsel %vm1193, %v1206, 0.0
          %v1233 = vsel %vm1194, %v1207, 0.0
          %v1234 = vsel %vm1195, %v1206, 0.0
          %v1235 = vsel %vm1196, %v1207, 0.0
          %v1236 = vsel %vm1197, %v1206, 0.0
          %v1237 = vsel %vm1198, %v1207, 0.0
          %v1238 = vsel %vm1199, %v1206, 0.0
          %v1239 = vsel %vm1200, %v1207, 0.0
          %v1240 = vadd.f32 %v1132, %v1208
          %v1241 = vadd.f32 %v1133, %v1209
          %v1242 = vadd.f32 %v1134, %v1210
          %v1243 = vadd.f32 %v1135, %v1211
          %v1244 = vadd.f32 %v1136, %v1212
          %v1245 = vadd.f32 %v1137, %v1213
          %v1246 = vadd.f32 %v1138, %v1214
          %v1247 = vadd.f32 %v1139, %v1215
          %v1248 = vadd.f32 %v1140, %v1216
          %v1249 = vadd.f32 %v1141, %v1217
          %v1250 = vadd.f32 %v1142, %v1218
          %v1251 = vadd.f32 %v1143, %v1219
          %v1252 = vadd.f32 %v1144, %v1220
          %v1253 = vadd.f32 %v1145, %v1221
          %v1254 = vadd.f32 %v1146, %v1222
          %v1255 = vadd.f32 %v1147, %v1223
          %v1256 = vadd.f32 %v1148, %v1224
          %v1257 = vadd.f32 %v1149, %v1225
          %v1258 = vadd.f32 %v1150, %v1226
          %v1259 = vadd.f32 %v1151, %v1227
          %v1260 = vadd.f32 %v1152, %v1228
          %v1261 = vadd.f32 %v1153, %v1229
          %v1262 = vadd.f32 %v1154, %v1230
          %v1263 = vadd.f32 %v1155, %v1231
          %v1264 = vadd.f32 %v1156, %v1232
          %v1265 = vadd.f32 %v1157, %v1233
          %v1266 = vadd.f32 %v1158, %v1234
          %v1267 = vadd.f32 %v1159, %v1235
          %v1268 = vadd.f32 %v1160, %v1236
          %v1269 = vadd.f32 %v1161, %v1237
          %v1270 = vadd.f32 %v1162, %v1238
          %v1271 = vadd.f32 %v1163, %v1239
          %v1272 = vsub.s32 %v514, %v547
          %v1273 = vperm.slane %v1272, 0
          %v1274 = vperm.slane %v1272, 4
          %v1275 = vperm.slane %v1273, 0
          %v1276 = vperm.slane %v1274, 0
          %vm1277 = vcmp.eq.s32.totalorder %v516, %v1275
          %vm1278 = vcmp.eq.s32.totalorder %v516, %v1276
          %vm1279 = vcmp.eq.s32.totalorder %v517, %v1275
          %vm1280 = vcmp.eq.s32.totalorder %v517, %v1276
          %vm1281 = vcmp.eq.s32.totalorder %v518, %v1275
          %vm1282 = vcmp.eq.s32.totalorder %v518, %v1276
          %vm1283 = vcmp.eq.s32.totalorder %v519, %v1275
          %vm1284 = vcmp.eq.s32.totalorder %v519, %v1276
          %vm1285 = vcmp.eq.s32.totalorder %v520, %v1275
          %vm1286 = vcmp.eq.s32.totalorder %v520, %v1276
          %vm1287 = vcmp.eq.s32.totalorder %v521, %v1275
          %vm1288 = vcmp.eq.s32.totalorder %v521, %v1276
          %vm1289 = vcmp.eq.s32.totalorder %v522, %v1275
          %vm1290 = vcmp.eq.s32.totalorder %v522, %v1276
          %vm1291 = vcmp.eq.s32.totalorder %v523, %v1275
          %vm1292 = vcmp.eq.s32.totalorder %v523, %v1276
          %vm1293 = vcmp.eq.s32.totalorder %v524, %v1275
          %vm1294 = vcmp.eq.s32.totalorder %v524, %v1276
          %vm1295 = vcmp.eq.s32.totalorder %v525, %v1275
          %vm1296 = vcmp.eq.s32.totalorder %v525, %v1276
          %vm1297 = vcmp.eq.s32.totalorder %v526, %v1275
          %vm1298 = vcmp.eq.s32.totalorder %v526, %v1276
          %vm1299 = vcmp.eq.s32.totalorder %v527, %v1275
          %vm1300 = vcmp.eq.s32.totalorder %v527, %v1276
          %vm1301 = vcmp.eq.s32.totalorder %v528, %v1275
          %vm1302 = vcmp.eq.s32.totalorder %v528, %v1276
          %vm1303 = vcmp.eq.s32.totalorder %v529, %v1275
          %vm1304 = vcmp.eq.s32.totalorder %v529, %v1276
          %vm1305 = vcmp.eq.s32.totalorder %v530, %v1275
          %vm1306 = vcmp.eq.s32.totalorder %v530, %v1276
          %vm1307 = vcmp.eq.s32.totalorder %v531, %v1275
          %vm1308 = vcmp.eq.s32.totalorder %v531, %v1276
          %v1310 = vperm.slane %v507, 0
          %v1311 = vperm.slane %v507, 4
          %v1314 = vperm.slane %v1310, 0
          %v1315 = vperm.slane %v1311, 0
          %v1316 = vsel %vm1277, %v1314, 0.0
          %v1317 = vsel %vm1278, %v1315, 0.0
          %v1318 = vsel %vm1279, %v1314, 0.0
          %v1319 = vsel %vm1280, %v1315, 0.0
          %v1320 = vsel %vm1281, %v1314, 0.0
          %v1321 = vsel %vm1282, %v1315, 0.0
          %v1322 = vsel %vm1283, %v1314, 0.0
          %v1323 = vsel %vm1284, %v1315, 0.0
          %v1324 = vsel %vm1285, %v1314, 0.0
          %v1325 = vsel %vm1286, %v1315, 0.0
          %v1326 = vsel %vm1287, %v1314, 0.0
          %v1327 = vsel %vm1288, %v1315, 0.0
          %v1328 = vsel %vm1289, %v1314, 0.0
          %v1329 = vsel %vm1290, %v1315, 0.0
          %v1330 = vsel %vm1291, %v1314, 0.0
          %v1331 = vsel %vm1292, %v1315, 0.0
          %v1332 = vsel %vm1293, %v1314, 0.0
          %v1333 = vsel %vm1294, %v1315, 0.0
          %v1334 = vsel %vm1295, %v1314, 0.0
          %v1335 = vsel %vm1296, %v1315, 0.0
          %v1336 = vsel %vm1297, %v1314, 0.0
          %v1337 = vsel %vm1298, %v1315, 0.0
          %v1338 = vsel %vm1299, %v1314, 0.0
          %v1339 = vsel %vm1300, %v1315, 0.0
          %v1340 = vsel %vm1301, %v1314, 0.0
          %v1341 = vsel %vm1302, %v1315, 0.0
          %v1342 = vsel %vm1303, %v1314, 0.0
          %v1343 = vsel %vm1304, %v1315, 0.0
          %v1344 = vsel %vm1305, %v1314, 0.0
          %v1345 = vsel %vm1306, %v1315, 0.0
          %v1346 = vsel %vm1307, %v1314, 0.0
          %v1347 = vsel %vm1308, %v1315, 0.0
          %v1348 = vadd.f32 %v1240, %v1316
          %v1349 = vadd.f32 %v1241, %v1317
          %v1350 = vadd.f32 %v1242, %v1318
          %v1351 = vadd.f32 %v1243, %v1319
          %v1352 = vadd.f32 %v1244, %v1320
          %v1353 = vadd.f32 %v1245, %v1321
          %v1354 = vadd.f32 %v1246, %v1322
          %v1355 = vadd.f32 %v1247, %v1323
          %v1356 = vadd.f32 %v1248, %v1324
          %v1357 = vadd.f32 %v1249, %v1325
          %v1358 = vadd.f32 %v1250, %v1326
          %v1359 = vadd.f32 %v1251, %v1327
          %v1360 = vadd.f32 %v1252, %v1328
          %v1361 = vadd.f32 %v1253, %v1329
          %v1362 = vadd.f32 %v1254, %v1330
          %v1363 = vadd.f32 %v1255, %v1331
          %v1364 = vadd.f32 %v1256, %v1332
          %v1365 = vadd.f32 %v1257, %v1333
          %v1366 = vadd.f32 %v1258, %v1334
          %v1367 = vadd.f32 %v1259, %v1335
          %v1368 = vadd.f32 %v1260, %v1336
          %v1369 = vadd.f32 %v1261, %v1337
          %v1370 = vadd.f32 %v1262, %v1338
          %v1371 = vadd.f32 %v1263, %v1339
          %v1372 = vadd.f32 %v1264, %v1340
          %v1373 = vadd.f32 %v1265, %v1341
          %v1374 = vadd.f32 %v1266, %v1342
          %v1375 = vadd.f32 %v1267, %v1343
          %v1376 = vadd.f32 %v1268, %v1344
          %v1377 = vadd.f32 %v1269, %v1345
          %v1378 = vadd.f32 %v1270, %v1346
          %v1379 = vadd.f32 %v1271, %v1347
          %v1380 = vpack.c.bf16 %v1350, %v1348
          %v1381 = vpack.c.bf16 %v1351, %v1349
          %v1382 = vpack.c.bf16 %v1354, %v1352
          %v1383 = vpack.c.bf16 %v1355, %v1353
          %v1384 = vpack.c.bf16 %v1358, %v1356
          %v1385 = vpack.c.bf16 %v1359, %v1357
          %v1386 = vpack.c.bf16 %v1362, %v1360
          %v1387 = vpack.c.bf16 %v1363, %v1361
          %v1388 = vpack.c.bf16 %v1366, %v1364
          %v1389 = vpack.c.bf16 %v1367, %v1365
          %v1390 = vpack.c.bf16 %v1370, %v1368
          %v1391 = vpack.c.bf16 %v1371, %v1369
          %v1392 = vpack.c.bf16 %v1374, %v1372
          %v1393 = vpack.c.bf16 %v1375, %v1373
          %v1394 = vpack.c.bf16 %v1378, %v1376
          %v1395 = vpack.c.bf16 %v1379, %v1377
          %s1396 = sshra.s32 %s546, 7
          %s1397 = sand.u32 %s546, 127
          %s1398 = scalar_lea.vmem %s340, %s1396 [#allocation14]
          %v1399 = vld [vmem:[%s1398] sm:$0x1]
          %v1400 = vld [vmem:[#allocation2] sm:$0xf]
          %1401 = vmatpush.bf16.msra.mxu0 %v1394
          %1402 = vmatpush.bf16.msra.mxu0 %v1392
          %1403 = vmatpush.bf16.msra.mxu0 %v1390
          %1404 = vmatpush.bf16.msra.mxu0 %v1388
          %1405 = vmatpush.bf16.msra.mxu0 %v1386
          %1406 = vmatpush.bf16.msra.mxu0 %v1384
          %1407 = vmatpush.bf16.msra.mxu0 %v1382
          %1408 = vmatpush.bf16.msra.mxu0 %v1380
          %1409 = vmatmul.bf16.gmra.mxu0 %v1399
          %v1410 = vpop.f32.mrf.mxu0
          %v1411 = vadd.f32 0.0, %v1410
          %v1412 = vpop.f32.mrf.mxu0
          %1413 = vdwg.mxu0
          %1414 = vmatpush.bf16.msra.mxu0 %v1395
          %1415 = vmatpush.bf16.msra.mxu0 %v1393
          %1416 = vmatpush.bf16.msra.mxu0 %v1391
          %1417 = vmatpush.bf16.msra.mxu0 %v1389
          %1418 = vmatpush.bf16.msra.mxu0 %v1387
          %1419 = vmatpush.bf16.msra.mxu0 %v1385
          %1420 = vmatpush.bf16.msra.mxu0 %v1383
          %1421 = vmatpush.bf16.msra.mxu0 %v1381
          %1422 = vmatmul.bf16.gmra.mxu0 %v1399
          %v1423 = vpop.f32.mrf.mxu0
          %v1424 = vadd.f32 0.0, %v1423
          %v1425 = vpop.f32.mrf.mxu0
          %1426 = vdwg.mxu0
          %v1429 = vrot.slane %v1424, 6
          %vm1430 = vcmask 1041408
          %v1431 = vsel %vm1430, %v1411, %v1429
          %v1433 = vadd.f32 %v1400, %v1431
          %1434 = vst [vmem:[#allocation2] sm:$0xf] %v1433
        $region73: #{tpu_custom_call.1} parent=43 // loop_footer
          %s543 = sadd.s32 %s541, 1
        $region74: #{tpu_custom_call.1} parent=43 // loop_footer_branch
          %540 = sbr.rel target = $region70
        $region75: #{tpu_custom_call.1} parent=43 // loop_exit
          _
        %v1435 = vld [vmem:[#allocation2] sm:$0xf]
        %1437 = vst [vmem:[#allocation1] ss:$4 sm:$0xff] %v1435
        %v1438 = vld.sshfl [vmem:[#allocation1] sm:$0xff pattern:$0x73625140]
        %v1439 = vld.sshfl [vmem:[#allocation1 + $0x8] sm:$0xff pattern:$0x73625140]
        %v1442 = vpack.c.bf16 %v1439, %v1438
        %v1444 = vrot.slane %v1442, 3
        %vm1445 = vcmask 1040384
        %v1448 = vsel %vm1445, %v1442, %v1444
        %1450 = vst [vmem:[%s375] sm:$0x3] %v1448
        %s1451 = sand.u32 %s188, 1
        %s1452 = scalar_lea.sflag [#allocation5], %s1451
        %s1453 = sand.u32 %s188, 1
        %s1454 = smul.addr %s1453, 2
        %s1455 = scalar_lea.vmem [#allocation16], %s1454
        // Predicated region
        $region76: #{tpu_custom_call.1} parent=43 // pred_check
          %p1456 = pneg %p198
        $region77: #{tpu_custom_call.1} parent=43 // pred_check_branch
          %1458 = sbr.rel (%p1456) target = $region79
        $region78: #{tpu_custom_call.1} parent=43 // pred_region
          %s1459 = smul.u32 2, %s35
          %1461 = vsyncadd %s1452, 0
          %s1462 = smul.addr %s34, 4
          %s1463 = sadd.s32 %s1459, %s1462
          %s1464 = scalar_lea.hbm %s6, %s1463
          %s1466 = sshll.u32 %s1455, 4
          %s1467 = int_to_ptr.vmem [resolvable:$true] %s1466
          %s1468 = sshll.u32 %s1464, 4
          %s1469 = int_to_ptr.hbm [resolvable:$true] %s1468
          %1471 = dma.vmem_to_hbm [thread:$0]  %s1467, 32, %s1469, %s1452
        $region79: #{tpu_custom_call.1} parent=43 // pred_fallthru
          _
      $region44: #{tpu_custom_call.1} parent=5 // pred_fallthru
        _
      %p1472 = scmp.le.s32.totalorder 2, %s25
      // Predicated region
      $region80: #{tpu_custom_call.1} parent=5 // pred_check
        %p1473 = pneg %p1472
      $region81: #{tpu_custom_call.1} parent=5 // pred_check_branch
        %1475 = sbr.rel (%p1473) target = $region83
      $region82: #{tpu_custom_call.1} parent=5 // pred_region
        %s1476 = ssub.s32 %s25, 2
        // Predicated region
        $region84: #{tpu_custom_call.1} parent=82 // pred_check
          %p1477 = pneg %p204
        $region85: #{tpu_custom_call.1} parent=82 // pred_check_branch
          %1479 = sbr.rel (%p1477) target = $region87
        $region86: #{tpu_custom_call.1} parent=82 // pred_region
          %s1480 = sand.u32 %s189, 1
          %s1481 = scalar_lea.sflag [#allocation5], %s1480
          %s1482 = sand.u32 %s189, 1
          %s1483 = smul.addr %s1482, 2
          %s1484 = scalar_lea.vmem [#allocation16], %s1483
          %1486 = dma.done %s1481, 32
        $region87: #{tpu_custom_call.1} parent=82 // pred_fallthru
          _
      $region83: #{tpu_custom_call.1} parent=5 // pred_fallthru
        _
    $region6: #{tpu_custom_call.1} parent=1 // loop_footer
      %s29 = sadd.s32 1, %s25
    $region7: #{tpu_custom_call.1} parent=1 // loop_footer_branch
      %24 = sbr.rel target = $region3
    $region8: #{tpu_custom_call.1} parent=1 // loop_exit
      _
    %1487 = vsyncpa [#allocation4], 1
    %s1488 = scalar_lea.sflag [#allocation4], 1
    %1489 = vsyncpa %s1488, 1
    %1490 = vsyncpa [#allocation15], 1
    %s1491 = scalar_lea.sflag [#allocation15], 1
    %1492 = vsyncpa %s1491, 1
    %1493 = vsyncpa [#allocation5], 1
    %s1494 = scalar_lea.sflag [#allocation5], 1
    %1495 = vsyncpa %s1494, 1
    %1496 = vsyncpa [#allocation6], 1
    %s1497 = scalar_lea.sflag [#allocation6], 1
    %1498 = vsyncpa %s1497, 1
    %1499 = vsyncpa [#allocation9], 1
    %1500 = vsyncpa [#allocation7], 1
    %s1501 = scalar_lea.sflag [#allocation7], 1
    %1502 = vsyncpa %s1501, 1
    %1503 = vsyncpa [#allocation12], 1

</llo_original>
